<compile_context>
chip_gen: v5e
topology: v5e:2x2
jax: 0.10.0
libtpu: 0.0.40
codegen_flags: <defaults>
</compile_context>

<pallas_src>
import functools

import jax
import jax.numpy as jnp
from jax.experimental import pallas as pl
from jax.experimental.pallas import tpu as pltpu


# --------------------------------------------------------------------------
# Kernel (one grid step = one timestep for one batch block)
# --------------------------------------------------------------------------
def meta_lstm_kernel(
    # per-(t, batch-block) input
    x_ref,                              # (Bb, I)        (T dim squeezed)
    # initial states (per batch block; only read at t == 0)
    mh0_ref, mc0_ref, hh0_ref, hc0_ref,
    # resident fused weights (constant index_map -> fetched once, stay in VMEM)
    wx_ref,        # (I,  4Hh+4H) = [W_ih_x^T | W_iH^T]   gate cols [i|f|o|g]
    wh_ref,        # (H,  4Hh+4H) = [W_ih_h^T | W_HH^T]
    whh_ref,       # (Hh, 4Hh)    = W_hh^T
    wz_ref,        # (Hh, 3E)     = [W_hzi^T | W_hzH^T | W_hzb^T]
    wdi_ref,       # (E,  4H)     = W_dziH^T
    wdh_ref,       # (E,  4H)     = W_dzHH^T
    wdb_ref,       # (E,  4H)     = W_bzH^T
    # biases (f32, shaped (1, N) for batch broadcast)
    bias_hyper_ref, bz_ref, bias_ref,
    # outputs
    hs_ref,        # (Bb, H+Hh)   per-step [main_h | meta_h]   (T squeezed)
    fin_ref,       # (Bb, 2H+2Hh) final [main_h|main_c|meta_h|meta_c]
    # VMEM scratch carrying the recurrent state across the T grid axis
    mh_s, mc_s, hh_s, hc_s,
    *, hidden_size, hyper_hidden_size, hyper_embedding_size):

    H, Hh, E = hidden_size, hyper_hidden_size, hyper_embedding_size
    cdt = wx_ref.dtype          # matmul operand dtype (f32 or bf16); acc is f32
    t = pl.program_id(1)

    @pl.when(t == 0)
    def _():
        mh_s[...] = mh0_ref[...]
        mc_s[...] = mc0_ref[...]
        hh_s[...] = hh0_ref[...]
        hc_s[...] = hc0_ref[...]

    x = x_ref[...]
    main_h = mh_s[...]
    main_c = mc_s[...]
    meta_h = hh_s[...]
    meta_c = hc_s[...]

    # --- phase 1: fused input/recurrent projections (3 MXU pushes) ---------
    mx = jnp.dot(x.astype(cdt), wx_ref[...],
                 preferred_element_type=jnp.float32)          # (Bb, 4Hh+4H)
    mh = jnp.dot(main_h.astype(cdt), wh_ref[...],
                 preferred_element_type=jnp.float32)          # (Bb, 4Hh+4H)
    mm = jnp.dot(meta_h.astype(cdt), whh_ref[...],
                 preferred_element_type=jnp.float32)          # (Bb, 4Hh)

    meta_pre = mx[:, :4 * Hh] + mh[:, :4 * Hh] + mm + bias_hyper_ref[...]
    x_iH = mx[:, 4 * Hh:]                                     # F.linear(x, W_iH)
    h_HH = mh[:, 4 * Hh:]                                     # F.linear(main_h, W_HH)

    # hyper (meta) gates: columns pre-reordered to [i|f|o|g] so we need one
    # sigmoid over 3Hh lanes and one tanh over Hh lanes (f32 epilogue).
    msig = jax.nn.sigmoid(meta_pre[:, :3 * Hh])
    meta_g = jnp.tanh(meta_pre[:, 3 * Hh:])
    meta_i = msig[:, :Hh]
    meta_f = msig[:, Hh:2 * Hh]
    meta_o = msig[:, 2 * Hh:]
    meta_c_new = meta_f * meta_c + meta_i * meta_g
    meta_h_new = meta_o * jnp.tanh(meta_c_new)

    # --- phase 2: fused hyper embeddings zi|zH|zb (1 MXU push) -------------
    zvec = jnp.dot(meta_h_new.astype(cdt), wz_ref[...],
                   preferred_element_type=jnp.float32) + bz_ref[...]   # (Bb, 3E)

    # --- phase 3: embedding -> 4H scalings (3 small dots, no zero padding) --
    dzi = jnp.dot(zvec[:, :E].astype(cdt), wdi_ref[...],
                  preferred_element_type=jnp.float32)
    dzH = jnp.dot(zvec[:, E:2 * E].astype(cdt), wdh_ref[...],
                  preferred_element_type=jnp.float32)
    dzb = jnp.dot(zvec[:, 2 * E:].astype(cdt), wdb_ref[...],
                  preferred_element_type=jnp.float32)

    pre = dzi * x_iH + dzH * h_HH + dzb + bias_ref[...]       # (Bb, 4H), ifog

    sig = jax.nn.sigmoid(pre[:, :3 * H])
    main_g = jnp.tanh(pre[:, 3 * H:])
    main_i = sig[:, :H]
    main_f = sig[:, H:2 * H]
    main_o = sig[:, 2 * H:]

    # TODO(synk): Dropout(0.5) on main_g is eval-mode identity here.
    main_c_new = main_f * main_c + main_i * main_g
    main_h_new = main_o * jnp.tanh(main_c_new)

    # carry state in VMEM (no HBM round trip between timesteps)
    mh_s[...] = main_h_new
    mc_s[...] = main_c_new
    hh_s[...] = meta_h_new
    hc_s[...] = meta_c_new

    # per-step output: direct slice stores into the lane-dense slab
    hs_ref[:, :H] = main_h_new.astype(hs_ref.dtype)
    hs_ref[:, H:] = meta_h_new.astype(hs_ref.dtype)

    # final states: written once at the last timestep (output block is
    # resident across the T axis, flushed when the batch block changes / end)
    @pl.when(t == pl.num_programs(1) - 1)
    def _():
        fin_ref[:, :H] = main_h_new.astype(fin_ref.dtype)
        fin_ref[:, H:2 * H] = main_c_new.astype(fin_ref.dtype)
        fin_ref[:, 2 * H:2 * H + Hh] = meta_h_new.astype(fin_ref.dtype)
        fin_ref[:, 2 * H + Hh:] = meta_c_new.astype(fin_ref.dtype)


# --------------------------------------------------------------------------
# Parameter init (matches PyTorch reset_parameters: uniform(-stdv, stdv))
# --------------------------------------------------------------------------
def init_params(key, input_size, hidden_size, hyper_hidden_size,
                hyper_embedding_size, task_num):
    stdv = 1.0 / (hidden_size ** 0.5)
    shapes = {
        "weight_iH": (task_num, 4 * hidden_size, input_size),
        "weight_HH": (task_num, 4 * hidden_size, hidden_size),
        "weight_ih": (4 * hyper_hidden_size, input_size + hidden_size),
        "weight_hh": (4 * hyper_hidden_size, hyper_hidden_size),
        "weight_hzi": (hyper_embedding_size, hyper_hidden_size),
        "weight_hzH": (hyper_embedding_size, hyper_hidden_size),
        "weight_hzb": (hyper_embedding_size, hyper_hidden_size),
        "weight_dziH": (4 * hidden_size, hyper_embedding_size),
        "weight_dzHH": (4 * hidden_size, hyper_embedding_size),
        "weight_bzH": (4 * hidden_size, hyper_embedding_size),
        "bias_i": (hyper_embedding_size,),
        "bias_H": (hyper_embedding_size,),
        "bias": (4 * hidden_size,),
        "bias_hyper": (4 * hyper_hidden_size,),
    }
    params = {}
    keys = jax.random.split(key, len(shapes))
    for k, (name, shape) in zip(keys, shapes.items()):
        params[name] = jax.random.uniform(
            k, shape, jnp.float32, minval=-stdv, maxval=stdv)
    return params


# --------------------------------------------------------------------------
# One-time weight preparation (hoisted out of the recurrent hot path).
# --------------------------------------------------------------------------
def _ifgo_to_ifog_cols(w_t, n):
    """Reorder gate-output columns of a (K, 4n) transposed weight
    from torch order [i|f|g|o] to [i|f|o|g]."""
    return jnp.concatenate(
        [w_t[:, :2 * n], w_t[:, 3 * n:4 * n], w_t[:, 2 * n:3 * n]], axis=1)


def _ifgo_to_ifog_vec(b, n):
    return jnp.concatenate([b[:2 * n], b[3 * n:4 * n], b[2 * n:3 * n]])


def prepare_weights(params, task_index, *, input_size, hidden_size,
                    hyper_hidden_size, hyper_embedding_size,
                    matmul_dtype=jnp.float32):
    """Task select, transpose, gate-reorder and fuse weights once."""
    H, Hh, E, I = hidden_size, hyper_hidden_size, hyper_embedding_size, input_size
    f32 = jnp.float32

    w_iH_t = _ifgo_to_ifog_cols(params["weight_iH"][task_index].T, H)    # (I, 4H)
    w_HH_t = _ifgo_to_ifog_cols(params["weight_HH"][task_index].T, H)    # (H, 4H)
    w_ih = params["weight_ih"]                                           # (4Hh, I+H)
    w_ih_x_t = _ifgo_to_ifog_cols(w_ih[:, :I].T, Hh)                     # (I, 4Hh)
    w_ih_h_t = _ifgo_to_ifog_cols(w_ih[:, I:].T, Hh)                     # (H, 4Hh)
    whh_t = _ifgo_to_ifog_cols(params["weight_hh"].T, Hh)                # (Hh, 4Hh)

    # shared-LHS fusions: x-side and main_h-side weights concatenated along N
    wx = jnp.concatenate([w_ih_x_t, w_iH_t], axis=1)                     # (I, 4Hh+4H)
    wh = jnp.concatenate([w_ih_h_t, w_HH_t], axis=1)                     # (H, 4Hh+4H)

    # zi / zH / zb fused along N
    wz = jnp.concatenate([params["weight_hzi"].T, params["weight_hzH"].T,
                          params["weight_hzb"].T], axis=1)               # (Hh, 3E)
    bz = jnp.concatenate([params["bias_i"], params["bias_H"],
                          jnp.zeros((E,), f32)]).reshape(1, -1)          # (1, 3E)

    # phase-3 weights kept separate (no zero-padded block-diagonal)
    wdi = _ifgo_to_ifog_cols(params["weight_dziH"].T, H)                 # (E, 4H)
    wdh = _ifgo_to_ifog_cols(params["weight_dzHH"].T, H)                 # (E, 4H)
    wdb = _ifgo_to_ifog_cols(params["weight_bzH"].T, H)                  # (E, 4H)

    bias_hyper = _ifgo_to_ifog_vec(params["bias_hyper"], Hh).reshape(1, -1)
    bias = _ifgo_to_ifog_vec(params["bias"], H).reshape(1, -1)

    return {
        "wx": wx.astype(matmul_dtype),
        "wh": wh.astype(matmul_dtype),
        "whh": whh_t.astype(matmul_dtype),
        "wz": wz.astype(matmul_dtype),
        "wdi": wdi.astype(matmul_dtype),
        "wdh": wdh.astype(matmul_dtype),
        "wdb": wdb.astype(matmul_dtype),
        # biases stay f32 (added to f32 accumulators; v5e-safe epilogue)
        "bias_hyper": bias_hyper.astype(f32),
        "bz": bz.astype(f32),
        "bias": bias.astype(f32),
    }


# --------------------------------------------------------------------------
# Time-fused sequence wrapper (the recurrent loop runs inside one pallas_call)
# --------------------------------------------------------------------------
def meta_lstm_sequence(prep, xs, main_h0, main_c0, meta_h0, meta_c0,
                       *, hidden_size, hyper_hidden_size, hyper_embedding_size,
                       batch_block=None, out_dtype=jnp.float32,
                       single_buffer_weights=False,
                       vmem_limit_bytes=64 * 1024 * 1024):
    T, B, input_size = xs.shape
    H, Hh, E = hidden_size, hyper_hidden_size, hyper_embedding_size

    if batch_block is None:
        # 256 fills the v6e/v7x 256-wide MXUs; use 128 on v5e if tuning there.
        batch_block = B if B <= 256 else 256
    assert B % batch_block == 0, "batch must be divisible by batch_block"
    nb = B // batch_block
    grid = (nb, T)   # batch outer ("parallel"), time inner ("arbitrary")

    def state_spec(n):
        return pl.BlockSpec((batch_block, n), lambda b, t: (b, 0))

    def resident_spec(arr):
        if single_buffer_weights:
            # Constant index_map => never re-fetched across grid steps, so a
            # single buffer suffices (halves resident-weight VMEM; important
            # at production sizes on v7x's 64 MiB VMEM).
            return pl.BlockSpec(arr.shape, lambda b, t: (0, 0),
                                pipeline_mode=pl.Buffered(1))
        return pl.BlockSpec(arr.shape, lambda b, t: (0, 0))

    inputs = (xs, main_h0, main_c0, meta_h0, meta_c0,
              prep["wx"], prep["wh"], prep["whh"], prep["wz"],
              prep["wdi"], prep["wdh"], prep["wdb"],
              prep["bias_hyper"], prep["bz"], prep["bias"])

    in_specs = (
        [pl.BlockSpec((None, batch_block, input_size), lambda b, t: (t, b, 0)),
         state_spec(H), state_spec(H), state_spec(Hh), state_spec(Hh)]
        + [resident_spec(prep[k]) for k in
           ("wx", "wh", "whh", "wz", "wdi", "wdh", "wdb",
            "bias_hyper", "bz", "bias")]
    )

    hs_width = H + Hh
    fin_width = 2 * H + 2 * Hh
    out_shape = (jax.ShapeDtypeStruct((T, B, hs_width), out_dtype),
                 jax.ShapeDtypeStruct((B, fin_width), jnp.float32))
    out_specs = (
        pl.BlockSpec((None, batch_block, hs_width), lambda b, t: (t, b, 0)),
        pl.BlockSpec((batch_block, fin_width), lambda b, t: (b, 0)),
    )

    scratch_shapes = [pltpu.VMEM((batch_block, H), jnp.float32),
                      pltpu.VMEM((batch_block, H), jnp.float32),
                      pltpu.VMEM((batch_block, Hh), jnp.float32),
                      pltpu.VMEM((batch_block, Hh), jnp.float32)]

    # advisory cost estimate so XLA schedules neighbours around the call
    flops_per_step = (2 * B * (input_size * (4 * Hh + 4 * H)
                               + H * (4 * Hh + 4 * H)
                               + Hh * 4 * Hh
                               + Hh * 3 * E
                               + 3 * E * 4 * H)
                      + 40 * B * (4 * H + 4 * Hh))
    transcendentals = T * 2 * B * (4 * H + 4 * Hh + H + Hh)
    bytes_accessed = (sum(int(a.size) * a.dtype.itemsize for a in inputs)
                      + T * B * hs_width * jnp.dtype(out_dtype).itemsize
                      + B * fin_width * 4)

    kernel = functools.partial(
        meta_lstm_kernel, hidden_size=H, hyper_hidden_size=Hh,
        hyper_embedding_size=E)

    hs, final = pl.pallas_call(
        kernel,
        out_shape=out_shape,
        grid=grid,
        in_specs=in_specs,
        out_specs=out_specs,
        scratch_shapes=scratch_shapes,
        compiler_params=pltpu.CompilerParams(
            dimension_semantics=("parallel", "arbitrary"),
            vmem_limit_bytes=vmem_limit_bytes),
        cost_estimate=pl.CostEstimate(
            flops=int(T * flops_per_step),
            transcendentals=int(transcendentals),
            bytes_accessed=int(bytes_accessed)),
    )(*inputs)

    main_hs = hs[:, :, :H]
    meta_hs = hs[:, :, H:]
    main_h_f = final[:, :H]
    main_c_f = final[:, H:2 * H]
    meta_h_f = final[:, 2 * H:2 * H + Hh]
    meta_c_f = final[:, 2 * H + Hh:]
    return (main_hs, meta_hs), ((main_h_f, main_c_f), (meta_h_f, meta_c_f))


def meta_lstm_cell(prep, x, main_h, main_c, meta_h, meta_c, **kwargs):
    """Single-step convenience wrapper matching MetaLSTMCell.forward."""
    _, ((mh, mc), (hh, hc)) = meta_lstm_sequence(
        prep, x[None], main_h, main_c, meta_h, meta_c, **kwargs)
    return (mh, mc), (hh, hc)


# --------------------------------------------------------------------------
# Pure-JAX reference (mirrors the PyTorch forward, eval-mode dropout)
# --------------------------------------------------------------------------
def meta_lstm_cell_ref(params, x, main_h, main_c, meta_h, meta_c, task_index,
                       *, hidden_size, hyper_hidden_size):
    H, Hh = hidden_size, hyper_hidden_size
    w_iH = params["weight_iH"][task_index]
    w_HH = params["weight_HH"][task_index]
    meta_pre = (jnp.concatenate([x, main_h], axis=1) @ params["weight_ih"].T
                + meta_h @ params["weight_hh"].T + params["bias_hyper"])
    mi = jax.nn.sigmoid(meta_pre[:, :Hh])
    mf = jax.nn.sigmoid(meta_pre[:, Hh:2 * Hh])
    mg = jnp.tanh(meta_pre[:, 2 * Hh:3 * Hh])
    mo = jax.nn.sigmoid(meta_pre[:, 3 * Hh:])
    meta_c = mf * meta_c + mi * mg
    meta_h = mo * jnp.tanh(meta_c)
    zi = meta_h @ params["weight_hzi"].T + params["bias_i"]
    zH = meta_h @ params["weight_hzH"].T + params["bias_H"]
    zb = meta_h @ params["weight_hzb"].T
    pre = ((zi @ params["weight_dziH"].T) * (x @ w_iH.T)
           + (zH @ params["weight_dzHH"].T) * (main_h @ w_HH.T)
           + (zb @ params["weight_bzH"].T) + params["bias"])
    i = jax.nn.sigmoid(pre[:, :H])
    f = jax.nn.sigmoid(pre[:, H:2 * H])
    g = jnp.tanh(pre[:, 2 * H:3 * H])
    o = jax.nn.sigmoid(pre[:, 3 * H:])
    main_c = f * main_c + i * g
    main_h = o * jnp.tanh(main_c)
    return (main_h, main_c), (meta_h, meta_c)


if __name__ == "__main__":
    T = 4
    B = 8
    input_size = 16
    hidden_size = 32
    hyper_hidden_size = 16
    hyper_embedding_size = 8
    task_num = 2
    task_index = 1

    key = jax.random.PRNGKey(0)
    k_params, k_x, k_mh, k_mc, k_hh, k_hc = jax.random.split(key, 6)

    params = init_params(k_params, input_size, hidden_size,
                         hyper_hidden_size, hyper_embedding_size, task_num)

    xs = jax.random.normal(k_x, (T, B, input_size), jnp.float32)
    main_h = jax.random.normal(k_mh, (B, hidden_size), jnp.float32)
    main_c = jax.random.normal(k_mc, (B, hidden_size), jnp.float32)
    meta_h = jax.random.normal(k_hh, (B, hyper_hidden_size), jnp.float32)
    meta_c = jax.random.normal(k_hc, (B, hyper_hidden_size), jnp.float32)

    # one-time weight prep (hoisted out of the recurrent hot path)
    prep = prepare_weights(
        params, task_index,
        input_size=input_size, hidden_size=hidden_size,
        hyper_hidden_size=hyper_hidden_size,
        hyper_embedding_size=hyper_embedding_size,
        matmul_dtype=jnp.float32)  # use jnp.bfloat16 in production (loosen tol)
    prep = jax.block_until_ready(prep)

    sizes = dict(hidden_size=hidden_size, hyper_hidden_size=hyper_hidden_size,
                 hyper_embedding_size=hyper_embedding_size)

    # ---- time-fused sequence --------------------------------------------
    (main_hs, meta_hs), ((mhf, mcf), (hhf, hcf)) = meta_lstm_sequence(
        prep, xs, main_h, main_c, meta_h, meta_c, **sizes)
    jax.block_until_ready((main_hs, meta_hs, mhf, mcf, hhf, hcf))

    # step-by-step pure-JAX reference
    rmh, rmc, rhh, rhc = main_h, main_c, meta_h, meta_c
    ref_main_hs, ref_meta_hs = [], []
    for t in range(T):
        (rmh, rmc), (rhh, rhc) = meta_lstm_cell_ref(
            params, xs[t], rmh, rmc, rhh, rhc, task_index,
            hidden_size=hidden_size, hyper_hidden_size=hyper_hidden_size)
        ref_main_hs.append(rmh)
        ref_meta_hs.append(rhh)
    ref_main_hs = jnp.stack(ref_main_hs)
    ref_meta_hs = jnp.stack(ref_meta_hs)

    atol = 1e-4
    assert jnp.allclose(main_hs, ref_main_hs, atol=atol), "per-step main_h mismatch"
    assert jnp.allclose(meta_hs, ref_meta_hs, atol=atol), "per-step meta_h mismatch"
    assert jnp.allclose(mhf, rmh, atol=atol), "final main_h mismatch"
    assert jnp.allclose(mcf, rmc, atol=atol), "final main_c mismatch"
    assert jnp.allclose(hhf, rhh, atol=atol), "final meta_h mismatch"
    assert jnp.allclose(hcf, rhc, atol=atol), "final meta_c mismatch"

    # ---- single-step wrapper (T == 1 path) -------------------------------
    (smh, smc), (shh, shc) = meta_lstm_cell(
        prep, xs[0], main_h, main_c, meta_h, meta_c, **sizes)
    jax.block_until_ready((smh, smc, shh, shc))
    (r1h, r1c), (r2h, r2c) = meta_lstm_cell_ref(
        params, xs[0], main_h, main_c, meta_h, meta_c, task_index,
        hidden_size=hidden_size, hyper_hidden_size=hyper_hidden_size)
    assert jnp.allclose(smh, r1h, atol=atol), "single-step main_h mismatch"
    assert jnp.allclose(smc, r1c, atol=atol), "single-step main_c mismatch"
    assert jnp.allclose(shh, r2h, atol=atol), "single-step meta_h mismatch"
    assert jnp.allclose(shc, r2c, atol=atol), "single-step meta_c mismatch"

    print("KERNEL_OK")
</pallas_src>

<mosaic_0001>
module attributes {stable_mosaic.version = 11 : i64} {
  func.func @meta_lstm_kernel(%arg0: i32, %arg1: i32, %arg2: memref<1x8x16xf32, #tpu.memory_space<vmem>>, %arg3: memref<8x32xf32, #tpu.memory_space<vmem>>, %arg4: memref<8x32xf32, #tpu.memory_space<vmem>>, %arg5: memref<8x16xf32, #tpu.memory_space<vmem>>, %arg6: memref<8x16xf32, #tpu.memory_space<vmem>>, %arg7: memref<16x192xf32, #tpu.memory_space<vmem>>, %arg8: memref<32x192xf32, #tpu.memory_space<vmem>>, %arg9: memref<16x64xf32, #tpu.memory_space<vmem>>, %arg10: memref<16x24xf32, #tpu.memory_space<vmem>>, %arg11: memref<8x128xf32, #tpu.memory_space<vmem>>, %arg12: memref<8x128xf32, #tpu.memory_space<vmem>>, %arg13: memref<8x128xf32, #tpu.memory_space<vmem>>, %arg14: memref<1x64xf32, #tpu.memory_space<vmem>>, %arg15: memref<1x24xf32, #tpu.memory_space<vmem>>, %arg16: memref<1x128xf32, #tpu.memory_space<vmem>>, %arg17: memref<1x8x48xf32, #tpu.memory_space<vmem>>, %arg18: memref<8x96xf32, #tpu.memory_space<vmem>>, %arg19: memref<8x32xf32, #tpu.memory_space<vmem>>, %arg20: memref<8x32xf32, #tpu.memory_space<vmem>>, %arg21: memref<8x16xf32, #tpu.memory_space<vmem>>, %arg22: memref<8x16xf32, #tpu.memory_space<vmem>>) attributes {dimension_semantics = [#tpu.dimension_semantics<parallel>, #tpu.dimension_semantics<arbitrary>], iteration_bounds = array<i64: 1, 4>, scalar_prefetch = 0 : i64, scratch_operands = 4 : i64, tpu.core_type = #tpu.core_type<tc>, window_params = [{transform_indices = @transform_0, window_bounds = array<i64: 1, 8, 16>}, {transform_indices = @transform_1, window_bounds = array<i64: 8, 32>}, {transform_indices = @transform_2, window_bounds = array<i64: 8, 32>}, {transform_indices = @transform_3, window_bounds = array<i64: 8, 16>}, {transform_indices = @transform_4, window_bounds = array<i64: 8, 16>}, {pipeline_mode = #tpu.pipeline_mode<synchronous>, transform_indices = @transform_5, window_bounds = array<i64: 16, 192>}, {pipeline_mode = #tpu.pipeline_mode<synchronous>, transform_indices = @transform_6, window_bounds = array<i64: 32, 192>}, {pipeline_mode = #tpu.pipeline_mode<synchronous>, transform_indices = @transform_7, window_bounds = array<i64: 16, 64>}, {pipeline_mode = #tpu.pipeline_mode<synchronous>, transform_indices = @transform_8, window_bounds = array<i64: 16, 24>}, {pipeline_mode = #tpu.pipeline_mode<synchronous>, transform_indices = @transform_9, window_bounds = array<i64: 8, 128>}, {pipeline_mode = #tpu.pipeline_mode<synchronous>, transform_indices = @transform_10, window_bounds = array<i64: 8, 128>}, {pipeline_mode = #tpu.pipeline_mode<synchronous>, transform_indices = @transform_11, window_bounds = array<i64: 8, 128>}, {pipeline_mode = #tpu.pipeline_mode<synchronous>, transform_indices = @transform_12, window_bounds = array<i64: 1, 64>}, {pipeline_mode = #tpu.pipeline_mode<synchronous>, transform_indices = @transform_13, window_bounds = array<i64: 1, 24>}, {pipeline_mode = #tpu.pipeline_mode<synchronous>, transform_indices = @transform_14, window_bounds = array<i64: 1, 128>}, {transform_indices = @transform_15, window_bounds = array<i64: 1, 8, 48>}, {transform_indices = @transform_16, window_bounds = array<i64: 8, 96>}]} {
    %c0_i32 = arith.constant 0 : i32
    %0 = arith.cmpi eq, %arg1, %c0_i32 : i32
    %1 = arith.extui %0 : i1 to i32
    %c0_i32_0 = arith.constant 0 : i32
    %2 = arith.cmpi ne, %1, %c0_i32_0 : i32
    scf.if %2 {
      %c0_53 = arith.constant 0 : index
      %c0_54 = arith.constant 0 : index
      %90 = vector.load %arg3[%c0_53, %c0_54] : memref<8x32xf32, #tpu.memory_space<vmem>>, vector<8x32xf32>
      %c0_55 = arith.constant 0 : index
      %c0_56 = arith.constant 0 : index
      %91 = vector.load %arg19[%c0_55, %c0_56] : memref<8x32xf32, #tpu.memory_space<vmem>>, vector<8x32xf32>
      tpu.vector_store %arg19[%c0_55, %c0_56], %90 {strides = array<i32>} : memref<8x32xf32, #tpu.memory_space<vmem>>, vector<8x32xf32>,
      %c0_57 = arith.constant 0 : index
      %c0_58 = arith.constant 0 : index
      %92 = vector.load %arg4[%c0_57, %c0_58] : memref<8x32xf32, #tpu.memory_space<vmem>>, vector<8x32xf32>
      %c0_59 = arith.constant 0 : index
      %c0_60 = arith.constant 0 : index
      %93 = vector.load %arg20[%c0_59, %c0_60] : memref<8x32xf32, #tpu.memory_space<vmem>>, vector<8x32xf32>
      tpu.vector_store %arg20[%c0_59, %c0_60], %92 {strides = array<i32>} : memref<8x32xf32, #tpu.memory_space<vmem>>, vector<8x32xf32>,
      %c0_61 = arith.constant 0 : index
      %c0_62 = arith.constant 0 : index
      %94 = vector.load %arg5[%c0_61, %c0_62] : memref<8x16xf32, #tpu.memory_space<vmem>>, vector<8x16xf32>
      %c0_63 = arith.constant 0 : index
      %c0_64 = arith.constant 0 : index
      %95 = vector.load %arg21[%c0_63, %c0_64] : memref<8x16xf32, #tpu.memory_space<vmem>>, vector<8x16xf32>
      tpu.vector_store %arg21[%c0_63, %c0_64], %94 {strides = array<i32>} : memref<8x16xf32, #tpu.memory_space<vmem>>, vector<8x16xf32>,
      %c0_65 = arith.constant 0 : index
      %c0_66 = arith.constant 0 : index
      %96 = vector.load %arg6[%c0_65, %c0_66] : memref<8x16xf32, #tpu.memory_space<vmem>>, vector<8x16xf32>
      %c0_67 = arith.constant 0 : index
      %c0_68 = arith.constant 0 : index
      %97 = vector.load %arg22[%c0_67, %c0_68] : memref<8x16xf32, #tpu.memory_space<vmem>>, vector<8x16xf32>
      tpu.vector_store %arg22[%c0_67, %c0_68], %96 {strides = array<i32>} : memref<8x16xf32, #tpu.memory_space<vmem>>, vector<8x16xf32>,
    } else {
    }
    %c0 = arith.constant 0 : index
    %c0_1 = arith.constant 0 : index
    %c0_2 = arith.constant 0 : index
    %3 = vector.load %arg2[%c0, %c0_1, %c0_2] : memref<1x8x16xf32, #tpu.memory_space<vmem>>, vector<1x8x16xf32>
    %4 = vector.shape_cast %3 : vector<1x8x16xf32> to vector<8x16xf32>
    %c0_3 = arith.constant 0 : index
    %c0_4 = arith.constant 0 : index
    %5 = vector.load %arg19[%c0_3, %c0_4] : memref<8x32xf32, #tpu.memory_space<vmem>>, vector<8x32xf32>
    %c0_5 = arith.constant 0 : index
    %c0_6 = arith.constant 0 : index
    %6 = vector.load %arg20[%c0_5, %c0_6] : memref<8x32xf32, #tpu.memory_space<vmem>>, vector<8x32xf32>
    %c0_7 = arith.constant 0 : index
    %c0_8 = arith.constant 0 : index
    %7 = vector.load %arg21[%c0_7, %c0_8] : memref<8x16xf32, #tpu.memory_space<vmem>>, vector<8x16xf32>
    %c0_9 = arith.constant 0 : index
    %c0_10 = arith.constant 0 : index
    %8 = vector.load %arg22[%c0_9, %c0_10] : memref<8x16xf32, #tpu.memory_space<vmem>>, vector<8x16xf32>
    %c0_11 = arith.constant 0 : index
    %c0_12 = arith.constant 0 : index
    %9 = vector.load %arg7[%c0_11, %c0_12] : memref<16x192xf32, #tpu.memory_space<vmem>>, vector<16x192xf32>
    %cst = arith.constant dense<0.000000e+00> : vector<8x192xf32>
    %10 = tpu.matmul %4, %9, %cst {dimension_numbers = #tpu.dot_dimension_numbers<[1], [0], [0], [1], [0, 0, 1, 1], [], []>} : vector<8x16xf32>, vector<16x192xf32>, vector<8x192xf32> -> vector<8x192xf32>
    %c0_13 = arith.constant 0 : index
    %c0_14 = arith.constant 0 : index
    %11 = vector.load %arg8[%c0_13, %c0_14] : memref<32x192xf32, #tpu.memory_space<vmem>>, vector<32x192xf32>
    %cst_15 = arith.constant dense<0.000000e+00> : vector<8x192xf32>
    %12 = tpu.matmul %5, %11, %cst_15 {dimension_numbers = #tpu.dot_dimension_numbers<[1], [0], [0], [1], [0, 0, 1, 1], [], []>} : vector<8x32xf32>, vector<32x192xf32>, vector<8x192xf32> -> vector<8x192xf32>
    %c0_16 = arith.constant 0 : index
    %c0_17 = arith.constant 0 : index
    %13 = vector.load %arg9[%c0_16, %c0_17] : memref<16x64xf32, #tpu.memory_space<vmem>>, vector<16x64xf32>
    %cst_18 = arith.constant dense<0.000000e+00> : vector<8x64xf32>
    %14 = tpu.matmul %7, %13, %cst_18 {dimension_numbers = #tpu.dot_dimension_numbers<[1], [0], [0], [1], [0, 0, 1, 1], [], []>} : vector<8x16xf32>, vector<16x64xf32>, vector<8x64xf32> -> vector<8x64xf32>
    %15 = vector.extract_strided_slice %10 {offsets = [0, 0], sizes = [8, 64], strides = [1, 1]} : vector<8x192xf32> to vector<8x64xf32>
    %16 = vector.extract_strided_slice %12 {offsets = [0, 0], sizes = [8, 64], strides = [1, 1]} : vector<8x192xf32> to vector<8x64xf32>
    %17 = arith.addf %15, %16 : vector<8x64xf32>
    %18 = arith.addf %17, %14 : vector<8x64xf32>
    %c0_19 = arith.constant 0 : index
    %c0_20 = arith.constant 0 : index
    %19 = vector.load %arg14[%c0_19, %c0_20] : memref<1x64xf32, #tpu.memory_space<vmem>>, vector<1x64xf32>
    %20 = vector.broadcast %19 : vector<1x64xf32> to vector<8x64xf32>
    %21 = arith.addf %18, %20 : vector<8x64xf32>
    %22 = vector.extract_strided_slice %10 {offsets = [0, 64], sizes = [8, 128], strides = [1, 1]} : vector<8x192xf32> to vector<8x128xf32>
    %23 = vector.extract_strided_slice %12 {offsets = [0, 64], sizes = [8, 128], strides = [1, 1]} : vector<8x192xf32> to vector<8x128xf32>
    %24 = vector.extract_strided_slice %21 {offsets = [0, 0], sizes = [8, 48], strides = [1, 1]} : vector<8x64xf32> to vector<8x48xf32>
    %25 = arith.negf %24 : vector<8x48xf32>
    %26 = math.exp %25 : vector<8x48xf32>
    %cst_21 = arith.constant 1.000000e+00 : f32
    %27 = vector.broadcast %cst_21 : f32 to vector<8x48xf32>
    %28 = arith.addf %27, %26 : vector<8x48xf32>
    %29 = arith.divf %27, %28 : vector<8x48xf32>
    %30 = vector.extract_strided_slice %21 {offsets = [0, 48], sizes = [8, 16], strides = [1, 1]} : vector<8x64xf32> to vector<8x16xf32>
    %31 = math.tanh %30 : vector<8x16xf32>
    %32 = vector.extract_strided_slice %29 {offsets = [0, 0], sizes = [8, 16], strides = [1, 1]} : vector<8x48xf32> to vector<8x16xf32>
    %33 = vector.extract_strided_slice %29 {offsets = [0, 16], sizes = [8, 16], strides = [1, 1]} : vector<8x48xf32> to vector<8x16xf32>
    %34 = vector.extract_strided_slice %29 {offsets = [0, 32], sizes = [8, 16], strides = [1, 1]} : vector<8x48xf32> to vector<8x16xf32>
    %35 = arith.mulf %33, %8 : vector<8x16xf32>
    %36 = arith.mulf %32, %31 : vector<8x16xf32>
    %37 = arith.addf %35, %36 : vector<8x16xf32>
    %38 = math.tanh %37 : vector<8x16xf32>
    %39 = arith.mulf %34, %38 : vector<8x16xf32>
    %c0_22 = arith.constant 0 : index
    %c0_23 = arith.constant 0 : index
    %40 = vector.load %arg10[%c0_22, %c0_23] : memref<16x24xf32, #tpu.memory_space<vmem>>, vector<16x24xf32>
    %cst_24 = arith.constant dense<0.000000e+00> : vector<8x24xf32>
    %41 = tpu.matmul %39, %40, %cst_24 {dimension_numbers = #tpu.dot_dimension_numbers<[1], [0], [0], [1], [0, 0, 1, 1], [], []>} : vector<8x16xf32>, vector<16x24xf32>, vector<8x24xf32> -> vector<8x24xf32>
    %c0_25 = arith.constant 0 : index
    %c0_26 = arith.constant 0 : index
    %42 = vector.load %arg15[%c0_25, %c0_26] : memref<1x24xf32, #tpu.memory_space<vmem>>, vector<1x24xf32>
    %43 = vector.broadcast %42 : vector<1x24xf32> to vector<8x24xf32>
    %44 = arith.addf %41, %43 : vector<8x24xf32>
    %45 = vector.extract_strided_slice %44 {offsets = [0, 0], sizes = [8, 8], strides = [1, 1]} : vector<8x24xf32> to vector<8x8xf32>
    %c0_27 = arith.constant 0 : index
    %c0_28 = arith.constant 0 : index
    %46 = vector.load %arg11[%c0_27, %c0_28] : memref<8x128xf32, #tpu.memory_space<vmem>>, vector<8x128xf32>
    %cst_29 = arith.constant dense<0.000000e+00> : vector<8x128xf32>
    %47 = tpu.matmul %45, %46, %cst_29 {dimension_numbers = #tpu.dot_dimension_numbers<[1], [0], [0], [1], [0, 0, 1, 1], [], []>} : vector<8x8xf32>, vector<8x128xf32>, vector<8x128xf32> -> vector<8x128xf32>
    %48 = vector.extract_strided_slice %44 {offsets = [0, 8], sizes = [8, 8], strides = [1, 1]} : vector<8x24xf32> to vector<8x8xf32>
    %c0_30 = arith.constant 0 : index
    %c0_31 = arith.constant 0 : index
    %49 = vector.load %arg12[%c0_30, %c0_31] : memref<8x128xf32, #tpu.memory_space<vmem>>, vector<8x128xf32>
    %cst_32 = arith.constant dense<0.000000e+00> : vector<8x128xf32>
    %50 = tpu.matmul %48, %49, %cst_32 {dimension_numbers = #tpu.dot_dimension_numbers<[1], [0], [0], [1], [0, 0, 1, 1], [], []>} : vector<8x8xf32>, vector<8x128xf32>, vector<8x128xf32> -> vector<8x128xf32>
    %51 = vector.extract_strided_slice %44 {offsets = [0, 16], sizes = [8, 8], strides = [1, 1]} : vector<8x24xf32> to vector<8x8xf32>
    %c0_33 = arith.constant 0 : index
    %c0_34 = arith.constant 0 : index
    %52 = vector.load %arg13[%c0_33, %c0_34] : memref<8x128xf32, #tpu.memory_space<vmem>>, vector<8x128xf32>
    %cst_35 = arith.constant dense<0.000000e+00> : vector<8x128xf32>
    %53 = tpu.matmul %51, %52, %cst_35 {dimension_numbers = #tpu.dot_dimension_numbers<[1], [0], [0], [1], [0, 0, 1, 1], [], []>} : vector<8x8xf32>, vector<8x128xf32>, vector<8x128xf32> -> vector<8x128xf32>
    %54 = arith.mulf %47, %22 : vector<8x128xf32>
    %55 = arith.mulf %50, %23 : vector<8x128xf32>
    %56 = arith.addf %54, %55 : vector<8x128xf32>
    %57 = arith.addf %56, %53 : vector<8x128xf32>
    %c0_36 = arith.constant 0 : index
    %c0_37 = arith.constant 0 : index
    %58 = vector.load %arg16[%c0_36, %c0_37] : memref<1x128xf32, #tpu.memory_space<vmem>>, vector<1x128xf32>
    %59 = vector.broadcast %58 : vector<1x128xf32> to vector<8x128xf32>
    %60 = arith.addf %57, %59 : vector<8x128xf32>
    %61 = vector.extract_strided_slice %60 {offsets = [0, 0], sizes = [8, 96], strides = [1, 1]} : vector<8x128xf32> to vector<8x96xf32>
    %62 = arith.negf %61 : vector<8x96xf32>
    %63 = math.exp %62 : vector<8x96xf32>
    %cst_38 = arith.constant 1.000000e+00 : f32
    %64 = vector.broadcast %cst_38 : f32 to vector<8x96xf32>
    %65 = arith.addf %64, %63 : vector<8x96xf32>
    %66 = arith.divf %64, %65 : vector<8x96xf32>
    %67 = vector.extract_strided_slice %60 {offsets = [0, 96], sizes = [8, 32], strides = [1, 1]} : vector<8x128xf32> to vector<8x32xf32>
    %68 = math.tanh %67 : vector<8x32xf32>
    %69 = vector.extract_strided_slice %66 {offsets = [0, 0], sizes = [8, 32], strides = [1, 1]} : vector<8x96xf32> to vector<8x32xf32>
    %70 = vector.extract_strided_slice %66 {offsets = [0, 32], sizes = [8, 32], strides = [1, 1]} : vector<8x96xf32> to vector<8x32xf32>
    %71 = vector.extract_strided_slice %66 {offsets = [0, 64], sizes = [8, 32], strides = [1, 1]} : vector<8x96xf32> to vector<8x32xf32>
    %72 = arith.mulf %70, %6 : vector<8x32xf32>
    %73 = arith.mulf %69, %68 : vector<8x32xf32>
    %74 = arith.addf %72, %73 : vector<8x32xf32>
    %75 = math.tanh %74 : vector<8x32xf32>
    %76 = arith.mulf %71, %75 : vector<8x32xf32>
    %c0_39 = arith.constant 0 : index
    %c0_40 = arith.constant 0 : index
    %77 = vector.load %arg19[%c0_39, %c0_40] : memref<8x32xf32, #tpu.memory_space<vmem>>, vector<8x32xf32>
    tpu.vector_store %arg19[%c0_39, %c0_40], %76 {strides = array<i32>} : memref<8x32xf32, #tpu.memory_space<vmem>>, vector<8x32xf32>,
    %c0_41 = arith.constant 0 : index
    %c0_42 = arith.constant 0 : index
    %78 = vector.load %arg20[%c0_41, %c0_42] : memref<8x32xf32, #tpu.memory_space<vmem>>, vector<8x32xf32>
    tpu.vector_store %arg20[%c0_41, %c0_42], %74 {strides = array<i32>} : memref<8x32xf32, #tpu.memory_space<vmem>>, vector<8x32xf32>,
    %c0_43 = arith.constant 0 : index
    %c0_44 = arith.constant 0 : index
    %79 = vector.load %arg21[%c0_43, %c0_44] : memref<8x16xf32, #tpu.memory_space<vmem>>, vector<8x16xf32>
    tpu.vector_store %arg21[%c0_43, %c0_44], %39 {strides = array<i32>} : memref<8x16xf32, #tpu.memory_space<vmem>>, vector<8x16xf32>,
    %c0_45 = arith.constant 0 : index
    %c0_46 = arith.constant 0 : index
    %80 = vector.load %arg22[%c0_45, %c0_46] : memref<8x16xf32, #tpu.memory_space<vmem>>, vector<8x16xf32>
    tpu.vector_store %arg22[%c0_45, %c0_46], %37 {strides = array<i32>} : memref<8x16xf32, #tpu.memory_space<vmem>>, vector<8x16xf32>,
    %c0_47 = arith.constant 0 : index
    %c0_48 = arith.constant 0 : index
    %c0_49 = arith.constant 0 : index
    %81 = vector.load %arg17[%c0_47, %c0_48, %c0_49] : memref<1x8x48xf32, #tpu.memory_space<vmem>>, vector<1x8x32xf32>
    %82 = vector.shape_cast %81 : vector<1x8x32xf32> to vector<8x32xf32>
    %83 = vector.shape_cast %76 : vector<8x32xf32> to vector<1x8x32xf32>
    tpu.vector_store %arg17[%c0_47, %c0_48, %c0_49], %83 {strides = array<i32>} : memref<1x8x48xf32, #tpu.memory_space<vmem>>, vector<1x8x32xf32>,
    %c0_50 = arith.constant 0 : index
    %c0_51 = arith.constant 0 : index
    %c32 = arith.constant 32 : index
    %84 = vector.load %arg17[%c0_50, %c0_51, %c32] : memref<1x8x48xf32, #tpu.memory_space<vmem>>, vector<1x8x16xf32>
    %85 = vector.shape_cast %84 : vector<1x8x16xf32> to vector<8x16xf32>
    %86 = vector.shape_cast %39 : vector<8x16xf32> to vector<1x8x16xf32>
    tpu.vector_store %arg17[%c0_50, %c0_51, %c32], %86 {strides = array<i32>} : memref<1x8x48xf32, #tpu.memory_space<vmem>>, vector<1x8x16xf32>,
    %c3_i32 = arith.constant 3 : i32
    %87 = arith.cmpi eq, %arg1, %c3_i32 : i32
    %88 = arith.extui %87 : i1 to i32
    %c0_i32_52 = arith.constant 0 : i32
    %89 = arith.cmpi ne, %88, %c0_i32_52 : i32
    scf.if %89 {
      %c0_53 = arith.constant 0 : index
      %c0_54 = arith.constant 0 : index
      %90 = vector.load %arg18[%c0_53, %c0_54] : memref<8x96xf32, #tpu.memory_space<vmem>>, vector<8x32xf32>
      tpu.vector_store %arg18[%c0_53, %c0_54], %76 {strides = array<i32>} : memref<8x96xf32, #tpu.memory_space<vmem>>, vector<8x32xf32>,
      %c0_55 = arith.constant 0 : index
      %c32_56 = arith.constant 32 : index
      %91 = vector.load %arg18[%c0_55, %c32_56] : memref<8x96xf32, #tpu.memory_space<vmem>>, vector<8x32xf32>
      tpu.vector_store %arg18[%c0_55, %c32_56], %74 {strides = array<i32>} : memref<8x96xf32, #tpu.memory_space<vmem>>, vector<8x32xf32>,
      %c0_57 = arith.constant 0 : index
      %c64 = arith.constant 64 : index
      %92 = vector.load %arg18[%c0_57, %c64] : memref<8x96xf32, #tpu.memory_space<vmem>>, vector<8x16xf32>
      tpu.vector_store %arg18[%c0_57, %c64], %39 {strides = array<i32>} : memref<8x96xf32, #tpu.memory_space<vmem>>, vector<8x16xf32>,
      %c0_58 = arith.constant 0 : index
      %c80 = arith.constant 80 : index
      %93 = vector.load %arg18[%c0_58, %c80] : memref<8x96xf32, #tpu.memory_space<vmem>>, vector<8x16xf32>
      tpu.vector_store %arg18[%c0_58, %c80], %37 {strides = array<i32>} : memref<8x96xf32, #tpu.memory_space<vmem>>, vector<8x16xf32>,
    } else {
    }
    return
  }
  func.func @transform_0(%arg0: i32, %arg1: i32) -> (i32, i32, i32) {
    %c0_i32 = arith.constant 0 : i32
    %c0_i32_0 = arith.constant 0 : i32
    return %arg1, %arg0, %c0_i32 : i32, i32, i32
  }
  func.func @transform_1(%arg0: i32, %arg1: i32) -> (i32, i32) {
    %c0_i32 = arith.constant 0 : i32
    %c0_i32_0 = arith.constant 0 : i32
    return %arg0, %c0_i32 : i32, i32
  }
  func.func @transform_2(%arg0: i32, %arg1: i32) -> (i32, i32) {
    %c0_i32 = arith.constant 0 : i32
    %c0_i32_0 = arith.constant 0 : i32
    return %arg0, %c0_i32 : i32, i32
  }
  func.func @transform_3(%arg0: i32, %arg1: i32) -> (i32, i32) {
    %c0_i32 = arith.constant 0 : i32
    %c0_i32_0 = arith.constant 0 : i32
    return %arg0, %c0_i32 : i32, i32
  }
  func.func @transform_4(%arg0: i32, %arg1: i32) -> (i32, i32) {
    %c0_i32 = arith.constant 0 : i32
    %c0_i32_0 = arith.constant 0 : i32
    return %arg0, %c0_i32 : i32, i32
  }
  func.func @transform_5(%arg0: i32, %arg1: i32) -> (i32, i32) {
    %c0_i32 = arith.constant 0 : i32
    %c0_i32_0 = arith.constant 0 : i32
    %c0_i32_1 = arith.constant 0 : i32
    return %c0_i32, %c0_i32_0 : i32, i32
  }
  func.func @transform_6(%arg0: i32, %arg1: i32) -> (i32, i32) {
    %c0_i32 = arith.constant 0 : i32
    %c0_i32_0 = arith.constant 0 : i32
    %c0_i32_1 = arith.constant 0 : i32
    return %c0_i32, %c0_i32_0 : i32, i32
  }
  func.func @transform_7(%arg0: i32, %arg1: i32) -> (i32, i32) {
    %c0_i32 = arith.constant 0 : i32
    %c0_i32_0 = arith.constant 0 : i32
    %c0_i32_1 = arith.constant 0 : i32
    return %c0_i32, %c0_i32_0 : i32, i32
  }
  func.func @transform_8(%arg0: i32, %arg1: i32) -> (i32, i32) {
    %c0_i32 = arith.constant 0 : i32
    %c0_i32_0 = arith.constant 0 : i32
    %c0_i32_1 = arith.constant 0 : i32
    return %c0_i32, %c0_i32_0 : i32, i32
  }
  func.func @transform_9(%arg0: i32, %arg1: i32) -> (i32, i32) {
    %c0_i32 = arith.constant 0 : i32
    %c0_i32_0 = arith.constant 0 : i32
    %c0_i32_1 = arith.constant 0 : i32
    return %c0_i32, %c0_i32_0 : i32, i32
  }
  func.func @transform_10(%arg0: i32, %arg1: i32) -> (i32, i32) {
    %c0_i32 = arith.constant 0 : i32
    %c0_i32_0 = arith.constant 0 : i32
    %c0_i32_1 = arith.constant 0 : i32
    return %c0_i32, %c0_i32_0 : i32, i32
  }
  func.func @transform_11(%arg0: i32, %arg1: i32) -> (i32, i32) {
    %c0_i32 = arith.constant 0 : i32
    %c0_i32_0 = arith.constant 0 : i32
    %c0_i32_1 = arith.constant 0 : i32
    return %c0_i32, %c0_i32_0 : i32, i32
  }
  func.func @transform_12(%arg0: i32, %arg1: i32) -> (i32, i32) {
    %c0_i32 = arith.constant 0 : i32
    %c0_i32_0 = arith.constant 0 : i32
    %c0_i32_1 = arith.constant 0 : i32
    return %c0_i32, %c0_i32_0 : i32, i32
  }
  func.func @transform_13(%arg0: i32, %arg1: i32) -> (i32, i32) {
    %c0_i32 = arith.constant 0 : i32
    %c0_i32_0 = arith.constant 0 : i32
    %c0_i32_1 = arith.constant 0 : i32
    return %c0_i32, %c0_i32_0 : i32, i32
  }
  func.func @transform_14(%arg0: i32, %arg1: i32) -> (i32, i32) {
    %c0_i32 = arith.constant 0 : i32
    %c0_i32_0 = arith.constant 0 : i32
    %c0_i32_1 = arith.constant 0 : i32
    return %c0_i32, %c0_i32_0 : i32, i32
  }
  func.func @transform_15(%arg0: i32, %arg1: i32) -> (i32, i32, i32) {
    %c0_i32 = arith.constant 0 : i32
    %c0_i32_0 = arith.constant 0 : i32
    return %arg1, %arg0, %c0_i32 : i32, i32, i32
  }
  func.func @transform_16(%arg0: i32, %arg1: i32) -> (i32, i32) {
    %c0_i32 = arith.constant 0 : i32
    %c0_i32_0 = arith.constant 0 : i32
    return %arg0, %c0_i32 : i32, i32
  }
}

</mosaic_0001>

<llo_original>
// kernel: tpu_custom_call.1
$region0: #{tpu_custom_call.1}
  #allocation0 [shape = 'u32[]', space=smem, size = 0x4, offset = 0x4, fixed_abs, tag = 'smem constant byte address 0x4 - core index']
  #allocation1 [shape = 'u32[72,128]{1,0:T(1,128)}', space=vmem, size = 0x9000, scoped, tag = 'internal scratch']
  #allocation2 [shape = 'f32[8,32]{1,0:T(8,128)}', space=vmem, size = 0x1000, scoped, tag = 'scratch operand']
  #allocation3 [shape = 'f32[8,32]{1,0:T(8,128)}', space=vmem, size = 0x1000, scoped, tag = 'scratch operand']
  #allocation4 [shape = 'f32[8,16]{1,0:T(8,128)}', space=vmem, size = 0x1000, scoped, tag = 'scratch operand']
  #allocation5 [shape = 'f32[8,16]{1,0:T(8,128)}', space=vmem, size = 0x1000, scoped, tag = 'scratch operand']
  %s0 = inlined_call_operand.hbm [shape: f32[4,8,16], index: 0, kind: input, shape index: {}]
  %s1 = inlined_call_operand.hbm [shape: f32[8,32], index: 1, kind: input, shape index: {}]
  %s2 = inlined_call_operand.hbm [shape: f32[8,32], index: 2, kind: input, shape index: {}]
  %s3 = inlined_call_operand.hbm [shape: f32[8,16], index: 3, kind: input, shape index: {}]
  %s4 = inlined_call_operand.hbm [shape: f32[8,16], index: 4, kind: input, shape index: {}]
  %s5 = inlined_call_operand.hbm [shape: f32[16,192], index: 5, kind: input, shape index: {}]
  %s6 = inlined_call_operand.hbm [shape: f32[32,192], index: 6, kind: input, shape index: {}]
  %s7 = inlined_call_operand.hbm [shape: f32[16,64], index: 7, kind: input, shape index: {}]
  %s8 = inlined_call_operand.hbm [shape: f32[16,24], index: 8, kind: input, shape index: {}]
  %s9 = inlined_call_operand.vmem [shape: f32[8,128], index: 9, kind: input, shape index: {}]
  %s10 = inlined_call_operand.hbm [shape: f32[8,128], index: 10, kind: input, shape index: {}]
  %s11 = inlined_call_operand.hbm [shape: f32[8,128], index: 11, kind: input, shape index: {}]
  %s12 = inlined_call_operand.vmem [shape: f32[1,64], index: 12, kind: input, shape index: {}]
  %s13 = inlined_call_operand.vmem [shape: f32[1,24], index: 13, kind: input, shape index: {}]
  %s14 = inlined_call_operand.vmem [shape: f32[1,128], index: 14, kind: input, shape index: {}]
  %s15 = inlined_call_operand.hbm [shape: f32[4,8,48], index: 15, kind: output, shape index: {0}]
  %s16 = inlined_call_operand.hbm [shape: f32[8,96], index: 16, kind: output, shape index: {1}]
  %17 = xla_tuple %s15, %s16
  %s18 = sld [smem:[#allocation0]]
  $region153: #{tpu_custom_call.1} parent=0
    _
  %s20 = ssub.s32 1, %s18
  %s21 = scalar_select 0, %s20, %s18
  $region1: #{tpu_custom_call.1} parent=0
    #allocation6 [shape = 'u8[8192]{0}', space=vmem, size = 0x2000, scoped, tag = 'input window, operand 0']
    #allocation7 [shape = 's32[2]{0}', space=sflag, size = 0x8, scoped, tag = 'scoped memory for tpu_custom_call.1']
    #allocation8 [shape = 's32[2]{0}', space=sflag, size = 0x8, scoped, tag = 'scoped memory for tpu_custom_call.1']
    #allocation9 [shape = 'u8[4096]{0}', space=vmem, size = 0x1000, scoped, tag = 'input window, operand 1, single buffered']
    #allocation10 [shape = 's32[1]{0}', space=sflag, size = 0x4, scoped, tag = 'scoped memory for tpu_custom_call.1']
    #allocation11 [shape = 'u8[4096]{0}', space=vmem, size = 0x1000, scoped, tag = 'input window, operand 2, single buffered']
    #allocation12 [shape = 'u8[4096]{0}', space=vmem, size = 0x1000, scoped, tag = 'input window, operand 3, single buffered']
    #allocation13 [shape = 's32[1]{0}', space=sflag, size = 0x4, scoped, tag = 'scoped memory for tpu_custom_call.1']
    #allocation14 [shape = 'u8[4096]{0}', space=vmem, size = 0x1000, scoped, tag = 'input window, operand 4, single buffered']
    #allocation15 [shape = 'u8[16384]{0}', space=vmem, size = 0x4000, scoped, tag = 'input window, operand 5, single buffered']
    #allocation16 [shape = 's32[1]{0}', space=sflag, size = 0x4, scoped, tag = 'scoped memory for tpu_custom_call.1']
    #allocation17 [shape = 'u8[32768]{0}', space=vmem, size = 0x8000, scoped, tag = 'input window, operand 6, single buffered']
    #allocation18 [shape = 'u8[8192]{0}', space=vmem, size = 0x2000, scoped, tag = 'input window, operand 7, single buffered']
    #allocation19 [shape = 's32[1]{0}', space=sflag, size = 0x4, scoped, tag = 'scoped memory for tpu_custom_call.1']
    #allocation20 [shape = 'u8[8192]{0}', space=vmem, size = 0x2000, scoped, tag = 'input window, operand 8, single buffered']
    #allocation21 [shape = 'u8[4096]{0}', space=vmem, size = 0x1000, scoped, tag = 'input window, operand 10, single buffered']
    #allocation22 [shape = 's32[1]{0}', space=sflag, size = 0x4, scoped, tag = 'scoped memory for tpu_custom_call.1']
    #allocation23 [shape = 'u8[4096]{0}', space=vmem, size = 0x1000, scoped, tag = 'input window, operand 11, single buffered']
    #allocation24 [shape = 'u8[8192]{0}', space=vmem, size = 0x2000, scoped, tag = 'output window, operand 0']
    #allocation25 [shape = 'u8[4096]{0}', space=vmem, size = 0x1000, scoped, tag = 'output window, operand 1, single buffered']
    #allocation26 [shape = 's32[1]{0}', space=sflag, size = 0x4, scoped, tag = 'scoped memory for tpu_custom_call.1']
    %22 = vsyncpa [#allocation7], 0
    %s23 = scalar_lea.sflag [#allocation7], 1
    %24 = vsyncpa %s23, 0
    %25 = vsyncpa [#allocation10], 0
    %26 = vsyncpa [#allocation13], 0
    %27 = vsyncpa [#allocation16], 0
    %28 = vsyncpa [#allocation19], 0
    %29 = vsyncpa [#allocation22], 0
    %30 = vsyncpa [#allocation8], 0
    %s31 = scalar_lea.sflag [#allocation8], 1
    %32 = vsyncpa %s31, 0
    %33 = vsyncpa [#allocation26], 0
    loop: start=0, step=1, limit=6
    $region2: #{tpu_custom_call.1} parent=1 // loop_pre_header
      _
    $region3: #{tpu_custom_call.1} parent=1 // loop_header
      %s35 = sphi 0, %s39
      %p36 = scmp.ge.s32.totalorder %s35, 6
      %s42 = sphi 0, %s54
      %s43 = sphi 0, %s50
      %s44 = sphi 0, %s42
      %s45 = sphi 0, %s43
      %s46 = sphi 0, %s44
      %s47 = sphi 0, %s45
      %s59 = sphi 0, %s61
      %s62 = sphi 0, %s59
      %s63 = sphi 0, %s62
      %s79 = sphi 0, %s63
      %s85 = sphi 0, %s87
      %s88 = sphi 0, %s85
      %s89 = sphi 0, %s88
      %s105 = sphi 0, %s89
      %s111 = sphi 0, %s113
      %s114 = sphi 0, %s111
      %s115 = sphi 0, %s114
      %s131 = sphi 0, %s115
      %s137 = sphi 0, %s139
      %s140 = sphi 0, %s137
      %s141 = sphi 0, %s140
      %s157 = sphi 0, %s141
      %s163 = sphi 0, %s165
      %s166 = sphi 0, %s163
      %s167 = sphi 0, %s166
      %s183 = sphi 0, %s167
      %s187 = sphi 0, %s187
      %s189 = sphi 0, %s187
      %s190 = sphi 0, %s189
      %s204 = sphi 0, %s190
      %s208 = sphi 0, %s208
      %s210 = sphi 0, %s208
      %s211 = sphi 0, %s210
      %s225 = sphi 0, %s211
      %s229 = sphi 0, %s229
      %s231 = sphi 0, %s229
      %s232 = sphi 0, %s231
      %s246 = sphi 0, %s232
      %s250 = sphi 0, %s250
      %s252 = sphi 0, %s250
      %s253 = sphi 0, %s252
      %s267 = sphi 0, %s253
      %s271 = sphi 0, %s271
      %s273 = sphi 0, %s271
      %s274 = sphi 0, %s273
      %s288 = sphi 0, %s274
      %s292 = sphi 0, %s292
      %s294 = sphi 0, %s292
      %s295 = sphi 0, %s294
      %s309 = sphi 0, %s295
      %s313 = sphi 0, %s313
      %s315 = sphi 0, %s313
      %s316 = sphi 0, %s315
      %s330 = sphi 0, %s316
      %s334 = sphi 0, %s334
      %s336 = sphi 0, %s334
      %s337 = sphi 0, %s336
      %s351 = sphi 0, %s337
      %s355 = sphi 0, %s355
      %s357 = sphi 0, %s355
      %s358 = sphi 0, %s357
      %s372 = sphi 0, %s358
      %s376 = sphi 0, %s376
      %s378 = sphi 0, %s376
      %s379 = sphi 0, %s378
      %s393 = sphi 0, %s379
      %s401 = sphi 0, %s403
      %s404 = sphi 0, %s401
      %s405 = sphi 0, %s404
      %s421 = sphi 0, %s405
      %s427 = sphi 0, %s429
      %s430 = sphi 0, %s427
      %s431 = sphi 0, %s430
      %s447 = sphi 0, %s431
    $region4: #{tpu_custom_call.1} parent=1 // loop_header_branch
      %38 = sbr.rel (%p36) target = $region8
    $region5: #{tpu_custom_call.1} parent=1 // loop_body
      %s40 = ssub.s32 %s35, 1
      %s41 = ssub.s32 %s35, 2
      %s48 = sadd.s32 1, %s43
      %p49 = scmp.ge.s32.totalorder %s48, 4
      %s50 = scalar_select %p49, 0, %s48
      %s51 = sadd.s32 1, %s42
      %s52 = scalar_select %p49, %s51, %s42
      %p53 = scmp.ge.s32.totalorder %s52, 1
      %s54 = scalar_select %p53, 0, %s52
      %s55 = ssub.s32 %s43, %s50
      %s56 = ssub.s32 %s42, %s54
      %s57 = sor.u32 %s55, %s56
      %p58 = scmp.eq.s32.totalorder %s57, 0
      %s60 = sadd.s32 %s59, 1
      %s61 = scalar_select %p58, %s59, %s60
      %p64 = pneg %p58
      %p65 = scmp.eq.s32.totalorder %s35, 3
      %p66 = por %p64, %p65
      %p67 = scmp.ne.s32.totalorder %s59, %s62
      %p68 = scmp.eq.s32.totalorder %s35, 0
      %p69 = por %p67, %p68
      %p70 = scmp.ne.s32.totalorder %s59, %s62
      %p71 = scmp.eq.s32.totalorder %s40, 3
      %p72 = por %p70, %p71
      %p73 = scmp.ne.s32.totalorder %s62, %s63
      %p74 = scmp.eq.s32.totalorder %s40, 0
      %p75 = por %p73, %p74
      %p76 = scmp.ne.s32.totalorder %s62, %s63
      %p77 = scmp.eq.s32.totalorder %s41, 3
      %p78 = por %p76, %p77
      %p80 = scmp.ne.s32.totalorder %s63, %s79
      %p81 = scmp.eq.s32.totalorder %s41, 0
      %p82 = por %p80, %p81
      %s83 = ssub.s32 %s42, %s54
      %p84 = scmp.eq.s32.totalorder %s83, 0
      %s86 = sadd.s32 %s85, 1
      %s87 = scalar_select %p84, %s85, %s86
      %p90 = pneg %p84
      %p91 = scmp.eq.s32.totalorder %s35, 3
      %p92 = por %p90, %p91
      %p93 = scmp.ne.s32.totalorder %s85, %s88
      %p94 = scmp.eq.s32.totalorder %s35, 0
      %p95 = por %p93, %p94
      %p96 = scmp.ne.s32.totalorder %s85, %s88
      %p97 = scmp.eq.s32.totalorder %s40, 3
      %p98 = por %p96, %p97
      %p99 = scmp.ne.s32.totalorder %s88, %s89
      %p100 = scmp.eq.s32.totalorder %s40, 0
      %p101 = por %p99, %p100
      %p102 = scmp.ne.s32.totalorder %s88, %s89
      %p103 = scmp.eq.s32.totalorder %s41, 3
      %p104 = por %p102, %p103
      %p106 = scmp.ne.s32.totalorder %s89, %s105
      %p107 = scmp.eq.s32.totalorder %s41, 0
      %p108 = por %p106, %p107
      %s109 = ssub.s32 %s42, %s54
      %p110 = scmp.eq.s32.totalorder %s109, 0
      %s112 = sadd.s32 %s111, 1
      %s113 = scalar_select %p110, %s111, %s112
      %p116 = pneg %p110
      %p117 = scmp.eq.s32.totalorder %s35, 3
      %p118 = por %p116, %p117
      %p119 = scmp.ne.s32.totalorder %s111, %s114
      %p120 = scmp.eq.s32.totalorder %s35, 0
      %p121 = por %p119, %p120
      %p122 = scmp.ne.s32.totalorder %s111, %s114
      %p123 = scmp.eq.s32.totalorder %s40, 3
      %p124 = por %p122, %p123
      %p125 = scmp.ne.s32.totalorder %s114, %s115
      %p126 = scmp.eq.s32.totalorder %s40, 0
      %p127 = por %p125, %p126
      %p128 = scmp.ne.s32.totalorder %s114, %s115
      %p129 = scmp.eq.s32.totalorder %s41, 3
      %p130 = por %p128, %p129
      %p132 = scmp.ne.s32.totalorder %s115, %s131
      %p133 = scmp.eq.s32.totalorder %s41, 0
      %p134 = por %p132, %p133
      %s135 = ssub.s32 %s42, %s54
      %p136 = scmp.eq.s32.totalorder %s135, 0
      %s138 = sadd.s32 %s137, 1
      %s139 = scalar_select %p136, %s137, %s138
      %p142 = pneg %p136
      %p143 = scmp.eq.s32.totalorder %s35, 3
      %p144 = por %p142, %p143
      %p145 = scmp.ne.s32.totalorder %s137, %s140
      %p146 = scmp.eq.s32.totalorder %s35, 0
      %p147 = por %p145, %p146
      %p148 = scmp.ne.s32.totalorder %s137, %s140
      %p149 = scmp.eq.s32.totalorder %s40, 3
      %p150 = por %p148, %p149
      %p151 = scmp.ne.s32.totalorder %s140, %s141
      %p152 = scmp.eq.s32.totalorder %s40, 0
      %p153 = por %p151, %p152
      %p154 = scmp.ne.s32.totalorder %s140, %s141
      %p155 = scmp.eq.s32.totalorder %s41, 3
      %p156 = por %p154, %p155
      %p158 = scmp.ne.s32.totalorder %s141, %s157
      %p159 = scmp.eq.s32.totalorder %s41, 0
      %p160 = por %p158, %p159
      %s161 = ssub.s32 %s42, %s54
      %p162 = scmp.eq.s32.totalorder %s161, 0
      %s164 = sadd.s32 %s163, 1
      %s165 = scalar_select %p162, %s163, %s164
      %p168 = pneg %p162
      %p169 = scmp.eq.s32.totalorder %s35, 3
      %p170 = por %p168, %p169
      %p171 = scmp.ne.s32.totalorder %s163, %s166
      %p172 = scmp.eq.s32.totalorder %s35, 0
      %p173 = por %p171, %p172
      %p174 = scmp.ne.s32.totalorder %s163, %s166
      %p175 = scmp.eq.s32.totalorder %s40, 3
      %p176 = por %p174, %p175
      %p177 = scmp.ne.s32.totalorder %s166, %s167
      %p178 = scmp.eq.s32.totalorder %s40, 0
      %p179 = por %p177, %p178
      %p180 = scmp.ne.s32.totalorder %s166, %s167
      %p181 = scmp.eq.s32.totalorder %s41, 3
      %p182 = por %p180, %p181
      %p184 = scmp.ne.s32.totalorder %s167, %s183
      %p185 = scmp.eq.s32.totalorder %s41, 0
      %p186 = por %p184, %p185
      %s188 = sadd.s32 %s187, 1
      %p191 = scmp.eq.s32.totalorder %s35, 3
      %p192 = scmp.ne.s32.totalorder %s187, %s189
      %p193 = scmp.eq.s32.totalorder %s35, 0
      %p194 = por %p192, %p193
      %p195 = scmp.ne.s32.totalorder %s187, %s189
      %p196 = scmp.eq.s32.totalorder %s40, 3
      %p197 = por %p195, %p196
      %p198 = scmp.ne.s32.totalorder %s189, %s190
      %p199 = scmp.eq.s32.totalorder %s40, 0
      %p200 = por %p198, %p199
      %p201 = scmp.ne.s32.totalorder %s189, %s190
      %p202 = scmp.eq.s32.totalorder %s41, 3
      %p203 = por %p201, %p202
      %p205 = scmp.ne.s32.totalorder %s190, %s204
      %p206 = scmp.eq.s32.totalorder %s41, 0
      %p207 = por %p205, %p206
      %s209 = sadd.s32 %s208, 1
      %p212 = scmp.eq.s32.totalorder %s35, 3
      %p213 = scmp.ne.s32.totalorder %s208, %s210
      %p214 = scmp.eq.s32.totalorder %s35, 0
      %p215 = por %p213, %p214
      %p216 = scmp.ne.s32.totalorder %s208, %s210
      %p217 = scmp.eq.s32.totalorder %s40, 3
      %p218 = por %p216, %p217
      %p219 = scmp.ne.s32.totalorder %s210, %s211
      %p220 = scmp.eq.s32.totalorder %s40, 0
      %p221 = por %p219, %p220
      %p222 = scmp.ne.s32.totalorder %s210, %s211
      %p223 = scmp.eq.s32.totalorder %s41, 3
      %p224 = por %p222, %p223
      %p226 = scmp.ne.s32.totalorder %s211, %s225
      %p227 = scmp.eq.s32.totalorder %s41, 0
      %p228 = por %p226, %p227
      %s230 = sadd.s32 %s229, 1
      %p233 = scmp.eq.s32.totalorder %s35, 3
      %p234 = scmp.ne.s32.totalorder %s229, %s231
      %p235 = scmp.eq.s32.totalorder %s35, 0
      %p236 = por %p234, %p235
      %p237 = scmp.ne.s32.totalorder %s229, %s231
      %p238 = scmp.eq.s32.totalorder %s40, 3
      %p239 = por %p237, %p238
      %p240 = scmp.ne.s32.totalorder %s231, %s232
      %p241 = scmp.eq.s32.totalorder %s40, 0
      %p242 = por %p240, %p241
      %p243 = scmp.ne.s32.totalorder %s231, %s232
      %p244 = scmp.eq.s32.totalorder %s41, 3
      %p245 = por %p243, %p244
      %p247 = scmp.ne.s32.totalorder %s232, %s246
      %p248 = scmp.eq.s32.totalorder %s41, 0
      %p249 = por %p247, %p248
      %s251 = sadd.s32 %s250, 1
      %p254 = scmp.eq.s32.totalorder %s35, 3
      %p255 = scmp.ne.s32.totalorder %s250, %s252
      %p256 = scmp.eq.s32.totalorder %s35, 0
      %p257 = por %p255, %p256
      %p258 = scmp.ne.s32.totalorder %s250, %s252
      %p259 = scmp.eq.s32.totalorder %s40, 3
      %p260 = por %p258, %p259
      %p261 = scmp.ne.s32.totalorder %s252, %s253
      %p262 = scmp.eq.s32.totalorder %s40, 0
      %p263 = por %p261, %p262
      %p264 = scmp.ne.s32.totalorder %s252, %s253
      %p265 = scmp.eq.s32.totalorder %s41, 3
      %p266 = por %p264, %p265
      %p268 = scmp.ne.s32.totalorder %s253, %s267
      %p269 = scmp.eq.s32.totalorder %s41, 0
      %p270 = por %p268, %p269
      %s272 = sadd.s32 %s271, 1
      %p275 = scmp.eq.s32.totalorder %s35, 3
      %p276 = scmp.ne.s32.totalorder %s271, %s273
      %p277 = scmp.eq.s32.totalorder %s35, 0
      %p278 = por %p276, %p277
      %p279 = scmp.ne.s32.totalorder %s271, %s273
      %p280 = scmp.eq.s32.totalorder %s40, 3
      %p281 = por %p279, %p280
      %p282 = scmp.ne.s32.totalorder %s273, %s274
      %p283 = scmp.eq.s32.totalorder %s40, 0
      %p284 = por %p282, %p283
      %p285 = scmp.ne.s32.totalorder %s273, %s274
      %p286 = scmp.eq.s32.totalorder %s41, 3
      %p287 = por %p285, %p286
      %p289 = scmp.ne.s32.totalorder %s274, %s288
      %p290 = scmp.eq.s32.totalorder %s41, 0
      %p291 = por %p289, %p290
      %s293 = sadd.s32 %s292, 1
      %p296 = scmp.eq.s32.totalorder %s35, 3
      %p297 = scmp.ne.s32.totalorder %s292, %s294
      %p298 = scmp.eq.s32.totalorder %s35, 0
      %p299 = por %p297, %p298
      %p300 = scmp.ne.s32.totalorder %s292, %s294
      %p301 = scmp.eq.s32.totalorder %s40, 3
      %p302 = por %p300, %p301
      %p303 = scmp.ne.s32.totalorder %s294, %s295
      %p304 = scmp.eq.s32.totalorder %s40, 0
      %p305 = por %p303, %p304
      %p306 = scmp.ne.s32.totalorder %s294, %s295
      %p307 = scmp.eq.s32.totalorder %s41, 3
      %p308 = por %p306, %p307
      %p310 = scmp.ne.s32.totalorder %s295, %s309
      %p311 = scmp.eq.s32.totalorder %s41, 0
      %p312 = por %p310, %p311
      %s314 = sadd.s32 %s313, 1
      %p317 = scmp.eq.s32.totalorder %s35, 3
      %p318 = scmp.ne.s32.totalorder %s313, %s315
      %p319 = scmp.eq.s32.totalorder %s35, 0
      %p320 = por %p318, %p319
      %p321 = scmp.ne.s32.totalorder %s313, %s315
      %p322 = scmp.eq.s32.totalorder %s40, 3
      %p323 = por %p321, %p322
      %p324 = scmp.ne.s32.totalorder %s315, %s316
      %p325 = scmp.eq.s32.totalorder %s40, 0
      %p326 = por %p324, %p325
      %p327 = scmp.ne.s32.totalorder %s315, %s316
      %p328 = scmp.eq.s32.totalorder %s41, 3
      %p329 = por %p327, %p328
      %p331 = scmp.ne.s32.totalorder %s316, %s330
      %p332 = scmp.eq.s32.totalorder %s41, 0
      %p333 = por %p331, %p332
      %s335 = sadd.s32 %s334, 1
      %p338 = scmp.eq.s32.totalorder %s35, 3
      %p339 = scmp.ne.s32.totalorder %s334, %s336
      %p340 = scmp.eq.s32.totalorder %s35, 0
      %p341 = por %p339, %p340
      %p342 = scmp.ne.s32.totalorder %s334, %s336
      %p343 = scmp.eq.s32.totalorder %s40, 3
      %p344 = por %p342, %p343
      %p345 = scmp.ne.s32.totalorder %s336, %s337
      %p346 = scmp.eq.s32.totalorder %s40, 0
      %p347 = por %p345, %p346
      %p348 = scmp.ne.s32.totalorder %s336, %s337
      %p349 = scmp.eq.s32.totalorder %s41, 3
      %p350 = por %p348, %p349
      %p352 = scmp.ne.s32.totalorder %s337, %s351
      %p353 = scmp.eq.s32.totalorder %s41, 0
      %p354 = por %p352, %p353
      %s356 = sadd.s32 %s355, 1
      %p359 = scmp.eq.s32.totalorder %s35, 3
      %p360 = scmp.ne.s32.totalorder %s355, %s357
      %p361 = scmp.eq.s32.totalorder %s35, 0
      %p362 = por %p360, %p361
      %p363 = scmp.ne.s32.totalorder %s355, %s357
      %p364 = scmp.eq.s32.totalorder %s40, 3
      %p365 = por %p363, %p364
      %p366 = scmp.ne.s32.totalorder %s357, %s358
      %p367 = scmp.eq.s32.totalorder %s40, 0
      %p368 = por %p366, %p367
      %p369 = scmp.ne.s32.totalorder %s357, %s358
      %p370 = scmp.eq.s32.totalorder %s41, 3
      %p371 = por %p369, %p370
      %p373 = scmp.ne.s32.totalorder %s358, %s372
      %p374 = scmp.eq.s32.totalorder %s41, 0
      %p375 = por %p373, %p374
      %s377 = sadd.s32 %s376, 1
      %p380 = scmp.eq.s32.totalorder %s35, 3
      %p381 = scmp.ne.s32.totalorder %s376, %s378
      %p382 = scmp.eq.s32.totalorder %s35, 0
      %p383 = por %p381, %p382
      %p384 = scmp.ne.s32.totalorder %s376, %s378
      %p385 = scmp.eq.s32.totalorder %s40, 3
      %p386 = por %p384, %p385
      %p387 = scmp.ne.s32.totalorder %s378, %s379
      %p388 = scmp.eq.s32.totalorder %s40, 0
      %p389 = por %p387, %p388
      %p390 = scmp.ne.s32.totalorder %s378, %s379
      %p391 = scmp.eq.s32.totalorder %s41, 3
      %p392 = por %p390, %p391
      %p394 = scmp.ne.s32.totalorder %s379, %s393
      %p395 = scmp.eq.s32.totalorder %s41, 0
      %p396 = por %p394, %p395
      %s397 = ssub.s32 %s43, %s50
      %s398 = ssub.s32 %s42, %s54
      %s399 = sor.u32 %s397, %s398
      %p400 = scmp.eq.s32.totalorder %s399, 0
      %s402 = sadd.s32 %s401, 1
      %s403 = scalar_select %p400, %s401, %s402
      %p406 = pneg %p400
      %p407 = scmp.eq.s32.totalorder %s35, 3
      %p408 = por %p406, %p407
      %p409 = scmp.ne.s32.totalorder %s401, %s404
      %p410 = scmp.eq.s32.totalorder %s35, 0
      %p411 = por %p409, %p410
      %p412 = scmp.ne.s32.totalorder %s401, %s404
      %p413 = scmp.eq.s32.totalorder %s40, 3
      %p414 = por %p412, %p413
      %p415 = scmp.ne.s32.totalorder %s404, %s405
      %p416 = scmp.eq.s32.totalorder %s40, 0
      %p417 = por %p415, %p416
      %p418 = scmp.ne.s32.totalorder %s404, %s405
      %p419 = scmp.eq.s32.totalorder %s41, 3
      %p420 = por %p418, %p419
      %p422 = scmp.ne.s32.totalorder %s405, %s421
      %p423 = scmp.eq.s32.totalorder %s41, 0
      %p424 = por %p422, %p423
      %s425 = ssub.s32 %s42, %s54
      %p426 = scmp.eq.s32.totalorder %s425, 0
      %s428 = sadd.s32 %s427, 1
      %s429 = scalar_select %p426, %s427, %s428
      %p432 = pneg %p426
      %p433 = scmp.eq.s32.totalorder %s35, 3
      %p434 = por %p432, %p433
      %p435 = scmp.ne.s32.totalorder %s427, %s430
      %p436 = scmp.eq.s32.totalorder %s35, 0
      %p437 = por %p435, %p436
      %p438 = scmp.ne.s32.totalorder %s427, %s430
      %p439 = scmp.eq.s32.totalorder %s40, 3
      %p440 = por %p438, %p439
      %p441 = scmp.ne.s32.totalorder %s430, %s431
      %p442 = scmp.eq.s32.totalorder %s40, 0
      %p443 = por %p441, %p442
      %p444 = scmp.ne.s32.totalorder %s430, %s431
      %p445 = scmp.eq.s32.totalorder %s41, 3
      %p446 = por %p444, %p445
      %p448 = scmp.ne.s32.totalorder %s431, %s447
      %p449 = scmp.eq.s32.totalorder %s41, 0
      %p450 = por %p448, %p449
      %p451 = scmp.le.s32.totalorder 1, %s35
      %p452 = scmp.lt.s32.totalorder %s35, 5
      %p453 = pnand %p451, %p452
      %p454 = pneg %p453
      // Predicated region
      $region9: #{tpu_custom_call.1} parent=5 // pred_check
        _
      $region10: #{tpu_custom_call.1} parent=5 // pred_check_branch
        %456 = sbr.rel (%p453) target = $region12
      $region11: #{tpu_custom_call.1} parent=5 // pred_region
        %s457 = ssub.s32 %s35, 1
        // Predicated region
        $region13: #{tpu_custom_call.1} parent=11 // pred_check
          %p458 = pneg %p101
        $region14: #{tpu_custom_call.1} parent=11 // pred_check_branch
          %460 = sbr.rel (%p458) target = $region16
        $region15: #{tpu_custom_call.1} parent=11 // pred_region
          %462 = vsyncadd [#allocation10], 0
          %s463 = smul.addr %s44, 8
          %s464 = scalar_lea.hbm %s1, %s463
          %s466 = sshll.u32 %s464, 4
          %s467 = int_to_ptr.hbm [resolvable:$true] %s466
          %s468 = sshll.u32 [#allocation9], 4
          %s469 = int_to_ptr.vmem [resolvable:$true] %s468
          %471 = dma.hbm_to_vmem [thread:$0]  %s467, 128, %s469, [#allocation10]
        $region16: #{tpu_custom_call.1} parent=11 // pred_fallthru
          _
        // Predicated region
        $region17: #{tpu_custom_call.1} parent=11 // pred_check
          %p472 = pneg %p127
        $region18: #{tpu_custom_call.1} parent=11 // pred_check_branch
          %474 = sbr.rel (%p472) target = $region20
        $region19: #{tpu_custom_call.1} parent=11 // pred_region
          %476 = vsyncadd [#allocation10], 0
          %s477 = smul.addr %s44, 8
          %s478 = scalar_lea.hbm %s2, %s477
          %s480 = sshll.u32 %s478, 4
          %s481 = int_to_ptr.hbm [resolvable:$true] %s480
          %s482 = sshll.u32 [#allocation11], 4
          %s483 = int_to_ptr.vmem [resolvable:$true] %s482
          %485 = dma.hbm_to_vmem [thread:$0]  %s481, 128, %s483, [#allocation10]
        $region20: #{tpu_custom_call.1} parent=11 // pred_fallthru
          _
        // Predicated region
        $region21: #{tpu_custom_call.1} parent=11 // pred_check
          %p486 = pneg %p153
        $region22: #{tpu_custom_call.1} parent=11 // pred_check_branch
          %488 = sbr.rel (%p486) target = $region24
        $region23: #{tpu_custom_call.1} parent=11 // pred_region
          %490 = vsyncadd [#allocation13], 0
          %s491 = smul.addr %s44, 8
          %s492 = scalar_lea.hbm %s3, %s491
          %s494 = sshll.u32 %s492, 4
          %s495 = int_to_ptr.hbm [resolvable:$true] %s494
          %s496 = sshll.u32 [#allocation12], 4
          %s497 = int_to_ptr.vmem [resolvable:$true] %s496
          %499 = dma.hbm_to_vmem [thread:$0]  %s495, 128, %s497, [#allocation13]
        $region24: #{tpu_custom_call.1} parent=11 // pred_fallthru
          _
        // Predicated region
        $region25: #{tpu_custom_call.1} parent=11 // pred_check
          %p500 = pneg %p179
        $region26: #{tpu_custom_call.1} parent=11 // pred_check_branch
          %502 = sbr.rel (%p500) target = $region28
        $region27: #{tpu_custom_call.1} parent=11 // pred_region
          %504 = vsyncadd [#allocation13], 0
          %s505 = smul.addr %s44, 8
          %s506 = scalar_lea.hbm %s4, %s505
          %s508 = sshll.u32 %s506, 4
          %s509 = int_to_ptr.hbm [resolvable:$true] %s508
          %s510 = sshll.u32 [#allocation14], 4
          %s511 = int_to_ptr.vmem [resolvable:$true] %s510
          %513 = dma.hbm_to_vmem [thread:$0]  %s509, 128, %s511, [#allocation13]
        $region28: #{tpu_custom_call.1} parent=11 // pred_fallthru
          _
        // Predicated region
        $region29: #{tpu_custom_call.1} parent=11 // pred_check
          %p514 = pneg %p200
        $region30: #{tpu_custom_call.1} parent=11 // pred_check_branch
          %516 = sbr.rel (%p514) target = $region32
        $region31: #{tpu_custom_call.1} parent=11 // pred_region
          %518 = vsyncadd [#allocation16], 0
          %s519 = sshll.u32 %s5, 4
          %s520 = int_to_ptr.hbm [resolvable:$true] %s519
          %s521 = sshll.u32 [#allocation15], 4
          %s522 = int_to_ptr.vmem [resolvable:$true] %s521
          %527 = dma.hbm_to_vmem [thread:$0]  %s520, 512, %s522, [#allocation16], 256, 256, 16
        $region32: #{tpu_custom_call.1} parent=11 // pred_fallthru
          _
        // Predicated region
        $region33: #{tpu_custom_call.1} parent=11 // pred_check
          %p528 = pneg %p221
        $region34: #{tpu_custom_call.1} parent=11 // pred_check_branch
          %530 = sbr.rel (%p528) target = $region36
        $region35: #{tpu_custom_call.1} parent=11 // pred_region
          %532 = vsyncadd [#allocation16], 0
          %s533 = sshll.u32 %s6, 4
          %s534 = int_to_ptr.hbm [resolvable:$true] %s533
          %s535 = sshll.u32 [#allocation17], 4
          %s536 = int_to_ptr.vmem [resolvable:$true] %s535
          %541 = dma.hbm_to_vmem [thread:$0]  %s534, 1024, %s536, [#allocation16], 256, 256, 16
        $region36: #{tpu_custom_call.1} parent=11 // pred_fallthru
          _
        // Predicated region
        $region37: #{tpu_custom_call.1} parent=11 // pred_check
          %p542 = pneg %p242
        $region38: #{tpu_custom_call.1} parent=11 // pred_check_branch
          %544 = sbr.rel (%p542) target = $region40
        $region39: #{tpu_custom_call.1} parent=11 // pred_region
          %546 = vsyncadd [#allocation19], 0
          %s547 = sshll.u32 %s7, 4
          %s548 = int_to_ptr.hbm [resolvable:$true] %s547
          %s549 = sshll.u32 [#allocation18], 4
          %s550 = int_to_ptr.vmem [resolvable:$true] %s549
          %555 = dma.hbm_to_vmem [thread:$0]  %s548, 256, %s550, [#allocation19], 128, 128, 8
        $region40: #{tpu_custom_call.1} parent=11 // pred_fallthru
          _
        // Predicated region
        $region41: #{tpu_custom_call.1} parent=11 // pred_check
          %p556 = pneg %p263
        $region42: #{tpu_custom_call.1} parent=11 // pred_check_branch
          %558 = sbr.rel (%p556) target = $region44
        $region43: #{tpu_custom_call.1} parent=11 // pred_region
          %560 = vsyncadd [#allocation19], 0
          %s561 = sshll.u32 %s8, 4
          %s562 = int_to_ptr.hbm [resolvable:$true] %s561
          %s563 = sshll.u32 [#allocation20], 4
          %s564 = int_to_ptr.vmem [resolvable:$true] %s563
          %569 = dma.hbm_to_vmem [thread:$0]  %s562, 256, %s564, [#allocation19], 128, 128, 8
        $region44: #{tpu_custom_call.1} parent=11 // pred_fallthru
          _
        // Predicated region
        $region45: #{tpu_custom_call.1} parent=11 // pred_check
          %p570 = pneg %p284
        $region46: #{tpu_custom_call.1} parent=11 // pred_check_branch
          %572 = sbr.rel (%p570) target = $region48
        $region47: #{tpu_custom_call.1} parent=11 // pred_region
          _
        $region48: #{tpu_custom_call.1} parent=11 // pred_fallthru
          _
        // Predicated region
        $region49: #{tpu_custom_call.1} parent=11 // pred_check
          %p573 = pneg %p305
        $region50: #{tpu_custom_call.1} parent=11 // pred_check_branch
          %575 = sbr.rel (%p573) target = $region52
        $region51: #{tpu_custom_call.1} parent=11 // pred_region
          %577 = vsyncadd [#allocation22], 0
          %s579 = sshll.u32 %s10, 4
          %s580 = int_to_ptr.hbm [resolvable:$true] %s579
          %s581 = sshll.u32 [#allocation21], 4
          %s582 = int_to_ptr.vmem [resolvable:$true] %s581
          %584 = dma.hbm_to_vmem [thread:$0]  %s580, 128, %s582, [#allocation22]
        $region52: #{tpu_custom_call.1} parent=11 // pred_fallthru
          _
        // Predicated region
        $region53: #{tpu_custom_call.1} parent=11 // pred_check
          %p585 = pneg %p326
        $region54: #{tpu_custom_call.1} parent=11 // pred_check_branch
          %587 = sbr.rel (%p585) target = $region56
        $region55: #{tpu_custom_call.1} parent=11 // pred_region
          %589 = vsyncadd [#allocation22], 0
          %s591 = sshll.u32 %s11, 4
          %s592 = int_to_ptr.hbm [resolvable:$true] %s591
          %s593 = sshll.u32 [#allocation23], 4
          %s594 = int_to_ptr.vmem [resolvable:$true] %s593
          %596 = dma.hbm_to_vmem [thread:$0]  %s592, 128, %s594, [#allocation22]
        $region56: #{tpu_custom_call.1} parent=11 // pred_fallthru
          _
        // Predicated region
        $region57: #{tpu_custom_call.1} parent=11 // pred_check
          %p597 = pneg %p347
        $region58: #{tpu_custom_call.1} parent=11 // pred_check_branch
          %599 = sbr.rel (%p597) target = $region60
        $region59: #{tpu_custom_call.1} parent=11 // pred_region
          _
        $region60: #{tpu_custom_call.1} parent=11 // pred_fallthru
          _
        // Predicated region
        $region61: #{tpu_custom_call.1} parent=11 // pred_check
          %p600 = pneg %p368
        $region62: #{tpu_custom_call.1} parent=11 // pred_check_branch
          %602 = sbr.rel (%p600) target = $region64
        $region63: #{tpu_custom_call.1} parent=11 // pred_region
          _
        $region64: #{tpu_custom_call.1} parent=11 // pred_fallthru
          _
        // Predicated region
        $region65: #{tpu_custom_call.1} parent=11 // pred_check
          %p603 = pneg %p389
        $region66: #{tpu_custom_call.1} parent=11 // pred_check_branch
          %605 = sbr.rel (%p603) target = $region68
        $region67: #{tpu_custom_call.1} parent=11 // pred_region
          _
        $region68: #{tpu_custom_call.1} parent=11 // pred_fallthru
          _
      $region12: #{tpu_custom_call.1} parent=5 // pred_fallthru
        _
      %p606 = scmp.lt.s32.totalorder %s35, 4
      // Predicated region
      $region69: #{tpu_custom_call.1} parent=5 // pred_check
        %p607 = pneg %p606
      $region70: #{tpu_custom_call.1} parent=5 // pred_check_branch
        %609 = sbr.rel (%p607) target = $region72
      $region71: #{tpu_custom_call.1} parent=5 // pred_region
        // Predicated region
        $region73: #{tpu_custom_call.1} parent=71 // pred_check
          %p610 = pneg %p69
        $region74: #{tpu_custom_call.1} parent=71 // pred_check_branch
          %612 = sbr.rel (%p610) target = $region76
        $region75: #{tpu_custom_call.1} parent=71 // pred_region
          %s613 = sand.u32 %s59, 1
          %s614 = scalar_lea.sflag [#allocation7], %s613
          %s615 = sand.u32 %s59, 1
          %s616 = smul.addr %s615, 8
          %s617 = scalar_lea.vmem [#allocation6], %s616
          %619 = vsyncadd %s614, 0
          %s620 = sadd.s32 %s42, %s43
          %s621 = smul.addr %s620, 8
          %s622 = scalar_lea.hbm %s0, %s621
          %s624 = sshll.u32 %s622, 4
          %s625 = int_to_ptr.hbm [resolvable:$true] %s624
          %s626 = sshll.u32 %s617, 4
          %s627 = int_to_ptr.vmem [resolvable:$true] %s626
          %629 = dma.hbm_to_vmem [thread:$0]  %s625, 128, %s627, %s614
        $region76: #{tpu_custom_call.1} parent=71 // pred_fallthru
          _
      $region72: #{tpu_custom_call.1} parent=5 // pred_fallthru
        _
      %p630 = scmp.le.s32.totalorder 1, %s35
      %p631 = scmp.lt.s32.totalorder %s35, 5
      %p632 = pnand %p630, %p631
      %p633 = pneg %p632
      // Predicated region
      $region77: #{tpu_custom_call.1} parent=5 // pred_check
        _
      $region78: #{tpu_custom_call.1} parent=5 // pred_check_branch
        %635 = sbr.rel (%p632) target = $region80
      $region79: #{tpu_custom_call.1} parent=5 // pred_region
        %s636 = ssub.s32 %s35, 1
        %s637 = sand.u32 %s62, 1
        %s638 = scalar_lea.sflag [#allocation7], %s637
        %s639 = sand.u32 %s62, 1
        %s640 = smul.addr %s639, 8
        %s641 = scalar_lea.vmem [#allocation6], %s640
        // Predicated region
        $region81: #{tpu_custom_call.1} parent=79 // pred_check
          %p642 = pneg %p75
        $region82: #{tpu_custom_call.1} parent=79 // pred_check_branch
          %644 = sbr.rel (%p642) target = $region84
        $region83: #{tpu_custom_call.1} parent=79 // pred_region
          %646 = dma.done %s638, 128
        $region84: #{tpu_custom_call.1} parent=79 // pred_fallthru
          _
        // Predicated region
        $region85: #{tpu_custom_call.1} parent=79 // pred_check
          %p647 = pneg %p101
        $region86: #{tpu_custom_call.1} parent=79 // pred_check_branch
          %649 = sbr.rel (%p647) target = $region88
        $region87: #{tpu_custom_call.1} parent=79 // pred_region
          %651 = dma.done [#allocation10], 128
        $region88: #{tpu_custom_call.1} parent=79 // pred_fallthru
          _
        // Predicated region
        $region89: #{tpu_custom_call.1} parent=79 // pred_check
          %p652 = pneg %p127
        $region90: #{tpu_custom_call.1} parent=79 // pred_check_branch
          %654 = sbr.rel (%p652) target = $region92
        $region91: #{tpu_custom_call.1} parent=79 // pred_region
          %656 = dma.done [#allocation10], 128
        $region92: #{tpu_custom_call.1} parent=79 // pred_fallthru
          _
        // Predicated region
        $region93: #{tpu_custom_call.1} parent=79 // pred_check
          %p657 = pneg %p153
        $region94: #{tpu_custom_call.1} parent=79 // pred_check_branch
          %659 = sbr.rel (%p657) target = $region96
        $region95: #{tpu_custom_call.1} parent=79 // pred_region
          %661 = dma.done [#allocation13], 128
        $region96: #{tpu_custom_call.1} parent=79 // pred_fallthru
          _
        // Predicated region
        $region97: #{tpu_custom_call.1} parent=79 // pred_check
          %p662 = pneg %p179
        $region98: #{tpu_custom_call.1} parent=79 // pred_check_branch
          %664 = sbr.rel (%p662) target = $region100
        $region99: #{tpu_custom_call.1} parent=79 // pred_region
          %666 = dma.done [#allocation13], 128
        $region100: #{tpu_custom_call.1} parent=79 // pred_fallthru
          _
        // Predicated region
        $region101: #{tpu_custom_call.1} parent=79 // pred_check
          %p667 = pneg %p200
        $region102: #{tpu_custom_call.1} parent=79 // pred_check_branch
          %669 = sbr.rel (%p667) target = $region104
        $region103: #{tpu_custom_call.1} parent=79 // pred_region
          %671 = dma.done [#allocation16], 512
        $region104: #{tpu_custom_call.1} parent=79 // pred_fallthru
          _
        // Predicated region
        $region105: #{tpu_custom_call.1} parent=79 // pred_check
          %p672 = pneg %p221
        $region106: #{tpu_custom_call.1} parent=79 // pred_check_branch
          %674 = sbr.rel (%p672) target = $region108
        $region107: #{tpu_custom_call.1} parent=79 // pred_region
          %676 = dma.done [#allocation16], 1024
        $region108: #{tpu_custom_call.1} parent=79 // pred_fallthru
          _
        // Predicated region
        $region109: #{tpu_custom_call.1} parent=79 // pred_check
          %p677 = pneg %p242
        $region110: #{tpu_custom_call.1} parent=79 // pred_check_branch
          %679 = sbr.rel (%p677) target = $region112
        $region111: #{tpu_custom_call.1} parent=79 // pred_region
          %681 = dma.done [#allocation19], 256
        $region112: #{tpu_custom_call.1} parent=79 // pred_fallthru
          _
        // Predicated region
        $region113: #{tpu_custom_call.1} parent=79 // pred_check
          %p682 = pneg %p263
        $region114: #{tpu_custom_call.1} parent=79 // pred_check_branch
          %684 = sbr.rel (%p682) target = $region116
        $region115: #{tpu_custom_call.1} parent=79 // pred_region
          %686 = dma.done [#allocation19], 256
        $region116: #{tpu_custom_call.1} parent=79 // pred_fallthru
          _
        // Predicated region
        $region117: #{tpu_custom_call.1} parent=79 // pred_check
          %p687 = pneg %p305
        $region118: #{tpu_custom_call.1} parent=79 // pred_check_branch
          %689 = sbr.rel (%p687) target = $region120
        $region119: #{tpu_custom_call.1} parent=79 // pred_region
          %691 = dma.done [#allocation22], 128
        $region120: #{tpu_custom_call.1} parent=79 // pred_fallthru
          _
        // Predicated region
        $region121: #{tpu_custom_call.1} parent=79 // pred_check
          %p692 = pneg %p326
        $region122: #{tpu_custom_call.1} parent=79 // pred_check_branch
          %694 = sbr.rel (%p692) target = $region124
        $region123: #{tpu_custom_call.1} parent=79 // pred_region
          %696 = dma.done [#allocation22], 128
        $region124: #{tpu_custom_call.1} parent=79 // pred_fallthru
          _
        %s697 = sand.u32 %s62, 1
        %s698 = scalar_lea.sflag [#allocation7], %s697
        %s699 = sand.u32 %s62, 1
        %s700 = smul.addr %s699, 8
        %s701 = scalar_lea.vmem [#allocation6], %s700
        %p702 = pneg %p75
        %p703 = pneg %p72
        %p704 = pneg %p101
        %p705 = pneg %p98
        %p706 = pneg %p127
        %p707 = pneg %p124
        %p708 = pneg %p153
        %p709 = pneg %p150
        %p710 = pneg %p179
        %p711 = pneg %p176
        %p712 = pneg %p200
        %p713 = pneg %p197
        %p714 = pneg %p221
        %p715 = pneg %p218
        %p716 = pneg %p242
        %p717 = pneg %p239
        %p718 = pneg %p263
        %p719 = pneg %p260
        %p720 = pneg %p284
        %p721 = pneg %p281
        %p722 = pneg %p305
        %p723 = pneg %p302
        %p724 = pneg %p326
        %p725 = pneg %p323
        %p726 = pneg %p347
        %p727 = pneg %p344
        %p728 = pneg %p368
        %p729 = pneg %p365
        %p730 = pneg %p389
        %p731 = pneg %p386
        %p732 = pneg %p417
        %p733 = pneg %p414
        %s734 = sand.u32 %s404, 1
        %s735 = scalar_lea.sflag [#allocation8], %s734
        %s736 = sand.u32 %s404, 1
        %s737 = smul.addr %s736, 8
        %s738 = scalar_lea.vmem [#allocation24], %s737
        %p739 = pneg %p443
        %p740 = pneg %p440
        %p741 = scmp.eq.s32.totalorder %s45, 0
        // Predicated region
        $region125: #{tpu_custom_call.1} parent=79 // pred_check
          %p742 = pneg %p741
        $region126: #{tpu_custom_call.1} parent=79 // pred_check_branch
          %744 = sbr.rel (%p742) target = $region128
        $region127: #{tpu_custom_call.1} parent=79 // pred_region
          %v745 = vld [vmem:[#allocation9] sm:$0xff]
          %vm746 = vcmask 261120
          %747 = vst.msk [vmem:[#allocation2] sm:$0xff] %vm746, %v745
          %v748 = vld [vmem:[#allocation11] sm:$0xff]
          %749 = vst.msk [vmem:[#allocation3] sm:$0xff] %vm746, %v748
          %v750 = vld [vmem:[#allocation12] sm:$0xff]
          %vm751 = vcmask 130048
          %752 = vst.msk [vmem:[#allocation4] sm:$0xff] %vm751, %v750
          %v753 = vld [vmem:[#allocation14] sm:$0xff]
          %754 = vst.msk [vmem:[#allocation5] sm:$0xff] %vm751, %v753
        $region128: #{tpu_custom_call.1} parent=79 // pred_fallthru
          _
        %v755 = vld [vmem:[%s641] sm:$0xff]
        %v756 = vld [vmem:[#allocation2] sm:$0xff]
        %v757 = vld [vmem:[#allocation3] sm:$0xff]
        %v758 = vld [vmem:[#allocation4] sm:$0xff]
        %v759 = vld [vmem:[#allocation5] sm:$0xff]
        %v760 = vld [vmem:[#allocation15] sm:$0xff]
        %v761 = vld [vmem:[#allocation15 + $0x8] sm:$0xff]
        %v762 = vld [vmem:[#allocation15 + $0x10] sm:$0xff]
        %v763 = vld [vmem:[#allocation15 + $0x18] sm:$0xff]
        %vm764 = vcmask 130048
        %v766 = vsel %vm764, %v755, 0
        %768 = vmatpush.msra.mxu0 0.0
        %769 = vmatpush.msra.mxu0 0.0
        %770 = vmatpush.msra.mxu0 0.0
        %771 = vmatpush.msra.mxu0 0.0
        %772 = vmatpush.msra.mxu0 0.0
        %773 = vmatpush.msra.mxu0 0.0
        %774 = vmatpush.msra.mxu0 0.0
        %775 = vmatpush.msra.mxu0 0.0
        %776 = vmatpush.msra.mxu0 0.0
        %777 = vmatpush.msra.mxu0 0.0
        %778 = vmatpush.msra.mxu0 0.0
        %779 = vmatpush.msra.mxu0 0.0
        %780 = vmatpush.msra.mxu0 0.0
        %781 = vmatpush.msra.mxu0 0.0
        %782 = vmatpush.msra.mxu0 %v762
        %783 = vmatpush.msra.mxu0 %v760
        %784 = vmatmul.f32.gmra.mxu0 %v766
        %v785 = vpop.f32.mrf.mxu0
        %v786 = vadd.f32 0.0, %v785
        %787 = vdwg.mxu0
        %788 = vmatpush.msra.mxu0 0.0
        %789 = vmatpush.msra.mxu0 0.0
        %790 = vmatpush.msra.mxu0 0.0
        %791 = vmatpush.msra.mxu0 0.0
        %792 = vmatpush.msra.mxu0 0.0
        %793 = vmatpush.msra.mxu0 0.0
        %794 = vmatpush.msra.mxu0 0.0
        %795 = vmatpush.msra.mxu0 0.0
        %796 = vmatpush.msra.mxu0 0.0
        %797 = vmatpush.msra.mxu0 0.0
        %798 = vmatpush.msra.mxu0 0.0
        %799 = vmatpush.msra.mxu0 0.0
        %800 = vmatpush.msra.mxu0 0.0
        %801 = vmatpush.msra.mxu0 0.0
        %802 = vmatpush.msra.mxu0 %v763
        %803 = vmatpush.msra.mxu0 %v761
        %804 = vmatmul.f32.gmra.mxu0 %v766
        %v805 = vpop.f32.mrf.mxu0
        %v806 = vadd.f32 0.0, %v805
        %807 = vdwg.mxu0
        %v808 = vld [vmem:[#allocation17] sm:$0xff]
        %v809 = vld [vmem:[#allocation17 + $0x8] sm:$0xff]
        %v810 = vld [vmem:[#allocation17 + $0x10] sm:$0xff]
        %v811 = vld [vmem:[#allocation17 + $0x18] sm:$0xff]
        %v812 = vld [vmem:[#allocation17 + $0x20] sm:$0xff]
        %v813 = vld [vmem:[#allocation17 + $0x28] sm:$0xff]
        %v814 = vld [vmem:[#allocation17 + $0x30] sm:$0xff]
        %v815 = vld [vmem:[#allocation17 + $0x38] sm:$0xff]
        %vm816 = vcmask 261120
        %v818 = vsel %vm816, %v756, 0
        %820 = vmatpush.msra.mxu0 0.0
        %821 = vmatpush.msra.mxu0 0.0
        %822 = vmatpush.msra.mxu0 0.0
        %823 = vmatpush.msra.mxu0 0.0
        %824 = vmatpush.msra.mxu0 0.0
        %825 = vmatpush.msra.mxu0 0.0
        %826 = vmatpush.msra.mxu0 0.0
        %827 = vmatpush.msra.mxu0 0.0
        %828 = vmatpush.msra.mxu0 0.0
        %829 = vmatpush.msra.mxu0 0.0
        %830 = vmatpush.msra.mxu0 0.0
        %831 = vmatpush.msra.mxu0 0.0
        %832 = vmatpush.msra.mxu0 %v814
        %833 = vmatpush.msra.mxu0 %v812
        %834 = vmatpush.msra.mxu0 %v810
        %835 = vmatpush.msra.mxu0 %v808
        %836 = vmatmul.f32.gmra.mxu0 %v818
        %v837 = vpop.f32.mrf.mxu0
        %v838 = vadd.f32 0.0, %v837
        %839 = vdwg.mxu0
        %840 = vmatpush.msra.mxu0 0.0
        %841 = vmatpush.msra.mxu0 0.0
        %842 = vmatpush.msra.mxu0 0.0
        %843 = vmatpush.msra.mxu0 0.0
        %844 = vmatpush.msra.mxu0 0.0
        %845 = vmatpush.msra.mxu0 0.0
        %846 = vmatpush.msra.mxu0 0.0
        %847 = vmatpush.msra.mxu0 0.0
        %848 = vmatpush.msra.mxu0 0.0
        %849 = vmatpush.msra.mxu0 0.0
        %850 = vmatpush.msra.mxu0 0.0
        %851 = vmatpush.msra.mxu0 0.0
        %852 = vmatpush.msra.mxu0 %v815
        %853 = vmatpush.msra.mxu0 %v813
        %854 = vmatpush.msra.mxu0 %v811
        %855 = vmatpush.msra.mxu0 %v809
        %856 = vmatmul.f32.gmra.mxu0 %v818
        %v857 = vpop.f32.mrf.mxu0
        %v858 = vadd.f32 0.0, %v857
        %859 = vdwg.mxu0
        %v860 = vld [vmem:[#allocation18] sm:$0xff]
        %v861 = vld [vmem:[#allocation18 + $0x8] sm:$0xff]
        %v863 = vsel %vm764, %v758, 0
        %865 = vmatpush.msra.mxu0 0.0
        %866 = vmatpush.msra.mxu0 0.0
        %867 = vmatpush.msra.mxu0 0.0
        %868 = vmatpush.msra.mxu0 0.0
        %869 = vmatpush.msra.mxu0 0.0
        %870 = vmatpush.msra.mxu0 0.0
        %871 = vmatpush.msra.mxu0 0.0
        %872 = vmatpush.msra.mxu0 0.0
        %873 = vmatpush.msra.mxu0 0.0
        %874 = vmatpush.msra.mxu0 0.0
        %875 = vmatpush.msra.mxu0 0.0
        %876 = vmatpush.msra.mxu0 0.0
        %877 = vmatpush.msra.mxu0 0.0
        %878 = vmatpush.msra.mxu0 0.0
        %879 = vmatpush.msra.mxu0 %v861
        %880 = vmatpush.msra.mxu0 %v860
        %881 = vmatmul.f32.gmra.mxu0 %v863
        %v882 = vpop.f32.mrf.mxu0
        %v883 = vadd.f32 0.0, %v882
        %884 = vdwg.mxu0
        %v885 = vadd.f32 %v786, %v838
        %v886 = vadd.f32 %v885, %v883
        %v887 = vld [vmem:[%s12] sm:$0x1]
        %v889 = vperm.slane %v887, 0
        %v891 = vadd.f32 %v886, %v889
        %v892 = vxor.u32 %v891, 2147483648
        %v893 = vmul.f32 %v892, 1.442695
        %v894 = vpow.pop %v893
        %v895 = vadd.f32 %v894, 1.0
        %v896 = vrcp.pop %v895
        %v897 = vmul.f32 %v895, %v896
        %v898 = vsub.f32 1.0, %v897
        %v899 = vmul.f32 %v896, %v898
        %v900 = vadd.f32 %v896, %v899
        %vm901 = vweird.f32 %v895
        %vm902 = vweird.f32 %v896
        %vm903 = vmor %vm901, %vm902
        %v904 = vsel %vm903, %v896, %v900
        %v905 = vand.u32 2147483647, %v895
        %vm906 = vcmp.eq.f32.partialorder %v905, 8.507059e+37
        %v907 = vand.u32 %v895, 2147483648
        %v908 = vor.u32 1.1754944e-38, %v907
        %v909 = vsel %vm906, %v908, %v904
        %v910 = vmul.f32 1.0, %v909
        %v911 = vtanh.pop %v891
        %913 = vrot.lane.b32.xlu0 %v759, 16
        %v914 = vpop.permute.xlu0 %913
        %v916 = vmul.f32 %v910, %v914
        %918 = vrot.lane.b32.xlu0 %v911, 80
        %v919 = vpop.permute.xlu0 %918
        %v921 = vmul.f32 %v910, %v919
        %923 = vrot.lane.b32.xlu0 %v921, 16
        %v924 = vpop.permute.xlu0 %923
        %v926 = vadd.f32 %v916, %v924
        %v927 = vtanh.pop %v926
        %929 = vrot.lane.b32.xlu0 %v927, 16
        %v930 = vpop.permute.xlu0 %929
        %v932 = vmul.f32 %v910, %v930
        %v933 = vld [vmem:[#allocation20] sm:$0xff]
        %v934 = vld [vmem:[#allocation20 + $0x8] sm:$0xff]
        %v935 = vld [vmem:[%s13] sm:$0x1]
        %v937 = vperm.slane %v935, 0
        %940 = vrot.lane.b32.xlu0 %v932, 96
        %v941 = vpop.permute.xlu0 %940
        %v942 = vsel %vm764, %v941, 0
        %944 = vmatpush.msra.mxu0 0.0
        %945 = vmatpush.msra.mxu0 0.0
        %946 = vmatpush.msra.mxu0 0.0
        %947 = vmatpush.msra.mxu0 0.0
        %948 = vmatpush.msra.mxu0 0.0
        %949 = vmatpush.msra.mxu0 0.0
        %950 = vmatpush.msra.mxu0 0.0
        %951 = vmatpush.msra.mxu0 0.0
        %952 = vmatpush.msra.mxu0 0.0
        %953 = vmatpush.msra.mxu0 0.0
        %954 = vmatpush.msra.mxu0 0.0
        %955 = vmatpush.msra.mxu0 0.0
        %956 = vmatpush.msra.mxu0 0.0
        %957 = vmatpush.msra.mxu0 0.0
        %958 = vmatpush.msra.mxu0 %v934
        %959 = vmatpush.msra.mxu0 %v933
        %960 = vmatmul.f32.gmra.mxu0 %v942
        %v961 = vpop.f32.mrf.mxu0
        %v962 = vadd.f32 %v937, %v961
        %963 = vdwg.mxu0
        %v964 = vld [vmem:[%s9] sm:$0xff]
        %vm965 = vcmask 64512
        %v967 = vsel %vm965, %v962, 0
        %969 = vmatpush.msra.mxu0 0.0
        %970 = vmatpush.msra.mxu0 0.0
        %971 = vmatpush.msra.mxu0 0.0
        %972 = vmatpush.msra.mxu0 0.0
        %973 = vmatpush.msra.mxu0 0.0
        %974 = vmatpush.msra.mxu0 0.0
        %975 = vmatpush.msra.mxu0 0.0
        %976 = vmatpush.msra.mxu0 0.0
        %977 = vmatpush.msra.mxu0 0.0
        %978 = vmatpush.msra.mxu0 0.0
        %979 = vmatpush.msra.mxu0 0.0
        %980 = vmatpush.msra.mxu0 0.0
        %981 = vmatpush.msra.mxu0 0.0
        %982 = vmatpush.msra.mxu0 0.0
        %983 = vmatpush.msra.mxu0 0.0
        %984 = vmatpush.msra.mxu0 %v964
        %985 = vmatmul.f32.gmra.mxu0 %v967
        %v986 = vpop.f32.mrf.mxu0
        %v987 = vadd.f32 0.0, %v986
        %988 = vdwg.mxu0
        %v989 = vld [vmem:[#allocation21] sm:$0xff]
        %990 = vrot.lane.b32.xlu0 %v962, 120
        %v991 = vpop.permute.xlu0 %990
        %v992 = vsel %vm965, %v991, 0
        %994 = vmatpush.msra.mxu0 0.0
        %995 = vmatpush.msra.mxu0 0.0
        %996 = vmatpush.msra.mxu0 0.0
        %997 = vmatpush.msra.mxu0 0.0
        %998 = vmatpush.msra.mxu0 0.0
        %999 = vmatpush.msra.mxu0 0.0
        %1000 = vmatpush.msra.mxu0 0.0
        %1001 = vmatpush.msra.mxu0 0.0
        %1002 = vmatpush.msra.mxu0 0.0
        %1003 = vmatpush.msra.mxu0 0.0
        %1004 = vmatpush.msra.mxu0 0.0
        %1005 = vmatpush.msra.mxu0 0.0
        %1006 = vmatpush.msra.mxu0 0.0
        %1007 = vmatpush.msra.mxu0 0.0
        %1008 = vmatpush.msra.mxu0 0.0
        %1009 = vmatpush.msra.mxu0 %v989
        %1010 = vmatmul.f32.gmra.mxu0 %v992
        %v1011 = vpop.f32.mrf.mxu0
        %v1012 = vadd.f32 0.0, %v1011
        %1013 = vdwg.mxu0
        %v1014 = vld [vmem:[#allocation23] sm:$0xff]
        %1015 = vrot.lane.b32.xlu0 %v962, 112
        %v1016 = vpop.permute.xlu0 %1015
        %v1017 = vsel %vm965, %v1016, 0
        %1019 = vmatpush.msra.mxu0 0.0
        %1020 = vmatpush.msra.mxu0 0.0
        %1021 = vmatpush.msra.mxu0 0.0
        %1022 = vmatpush.msra.mxu0 0.0
        %1023 = vmatpush.msra.mxu0 0.0
        %1024 = vmatpush.msra.mxu0 0.0
        %1025 = vmatpush.msra.mxu0 0.0
        %1026 = vmatpush.msra.mxu0 0.0
        %1027 = vmatpush.msra.mxu0 0.0
        %1028 = vmatpush.msra.mxu0 0.0
        %1029 = vmatpush.msra.mxu0 0.0
        %1030 = vmatpush.msra.mxu0 0.0
        %1031 = vmatpush.msra.mxu0 0.0
        %1032 = vmatpush.msra.mxu0 0.0
        %1033 = vmatpush.msra.mxu0 0.0
        %1034 = vmatpush.msra.mxu0 %v1014
        %1035 = vmatmul.f32.gmra.mxu0 %v1017
        %v1036 = vpop.f32.mrf.mxu0
        %v1037 = vadd.f32 0.0, %v1036
        %1038 = vdwg.mxu0
        %1041 = vrot.lane.b32.xlu0 %v786, 64
        %v1042 = vpop.permute.xlu0 %1041
        %1043 = vrot.lane.b32.xlu0 %v806, 64
        %v1044 = vpop.permute.xlu0 %1043
        %vm1045 = vcmask 523264
        %v1046 = vsel %vm1045, %v1042, %v1044
        %v1048 = vmul.f32 %v987, %v1046
        %1051 = vrot.lane.b32.xlu0 %v838, 64
        %v1052 = vpop.permute.xlu0 %1051
        %1053 = vrot.lane.b32.xlu0 %v858, 64
        %v1054 = vpop.permute.xlu0 %1053
        %v1055 = vsel %vm1045, %v1052, %v1054
        %v1057 = vmul.f32 %v1012, %v1055
        %v1058 = vadd.f32 %v1048, %v1057
        %v1059 = vadd.f32 %v1058, %v1037
        %v1060 = vld [vmem:[%s14] sm:$0x1]
        %v1062 = vperm.slane %v1060, 0
        %v1064 = vadd.f32 %v1059, %v1062
        %v1065 = vxor.u32 %v1064, 2147483648
        %v1066 = vmul.f32 %v1065, 1.442695
        %v1067 = vpow.pop %v1066
        %v1068 = vadd.f32 %v1067, 1.0
        %v1069 = vrcp.pop %v1068
        %v1070 = vmul.f32 %v1068, %v1069
        %v1071 = vsub.f32 1.0, %v1070
        %v1072 = vmul.f32 %v1069, %v1071
        %v1073 = vadd.f32 %v1069, %v1072
        %vm1074 = vweird.f32 %v1068
        %vm1075 = vweird.f32 %v1069
        %vm1076 = vmor %vm1074, %vm1075
        %v1077 = vsel %vm1076, %v1069, %v1073
        %v1078 = vand.u32 2147483647, %v1068
        %vm1079 = vcmp.eq.f32.partialorder %v1078, 8.507059e+37
        %v1080 = vand.u32 %v1068, 2147483648
        %v1081 = vor.u32 1.1754944e-38, %v1080
        %v1082 = vsel %vm1079, %v1081, %v1077
        %v1083 = vmul.f32 1.0, %v1082
        %v1084 = vtanh.pop %v1064
        %1086 = vrot.lane.b32.xlu0 %v757, 32
        %v1087 = vpop.permute.xlu0 %1086
        %v1089 = vmul.f32 %v1083, %v1087
        %1091 = vrot.lane.b32.xlu0 %v1084, 32
        %v1092 = vpop.permute.xlu0 %1091
        %v1094 = vmul.f32 %v1083, %v1092
        %1096 = vrot.lane.b32.xlu0 %v1094, 32
        %v1097 = vpop.permute.xlu0 %1096
        %v1099 = vadd.f32 %v1089, %v1097
        %v1100 = vtanh.pop %v1099
        %1102 = vrot.lane.b32.xlu0 %v1100, 32
        %v1103 = vpop.permute.xlu0 %1102
        %v1105 = vmul.f32 %v1083, %v1103
        %1107 = vrot.lane.b32.xlu0 %v1105, 64
        %v1108 = vpop.permute.xlu0 %1107
        %1110 = vst.msk [vmem:[#allocation2] sm:$0xff] %vm816, %v1108
        %1112 = vrot.lane.b32.xlu0 %v1099, 96
        %v1113 = vpop.permute.xlu0 %1112
        %1115 = vst.msk [vmem:[#allocation3] sm:$0xff] %vm816, %v1113
        %1117 = vst.msk [vmem:[#allocation4] sm:$0xff] %vm764, %v941
        %1119 = vrot.lane.b32.xlu0 %v926, 112
        %v1120 = vpop.permute.xlu0 %1119
        %1122 = vst.msk [vmem:[#allocation5] sm:$0xff] %vm764, %v1120
        %1123 = vst.msk [vmem:[%s738] sm:$0xff] %vm816, %v1108
        %vm1124 = vcmask 392448
        %1125 = vst.msk [vmem:[%s738] sm:$0xff] %vm1124, %v932
        %p1126 = scmp.eq.s32.totalorder %s45, 3
        // Predicated region
        $region129: #{tpu_custom_call.1} parent=79 // pred_check
          %p1127 = pneg %p1126
        $region130: #{tpu_custom_call.1} parent=79 // pred_check_branch
          %1129 = sbr.rel (%p1127) target = $region132
        $region131: #{tpu_custom_call.1} parent=79 // pred_region
          %1130 = vst.msk [vmem:[#allocation25] sm:$0xff] %vm816, %v1108
          %vm1131 = vcmask 523520
          %1132 = vst.msk [vmem:[#allocation25] sm:$0xff] %vm1131, %v1099
          %1133 = vrot.lane.b32.xlu0 %v932, 32
          %v1134 = vpop.permute.xlu0 %1133
          %vm1136 = vcmask 654848
          %1137 = vst.msk [vmem:[#allocation25] sm:$0xff] %vm1136, %v1134
          %1138 = vrot.lane.b32.xlu0 %v926, 64
          %v1139 = vpop.permute.xlu0 %1138
          %vm1141 = vcmask 786048
          %1142 = vst.msk [vmem:[#allocation25] sm:$0xff] %vm1141, %v1139
        $region132: #{tpu_custom_call.1} parent=79 // pred_fallthru
          _
        %s1143 = sand.u32 %s404, 1
        %s1144 = scalar_lea.sflag [#allocation8], %s1143
        %s1145 = sand.u32 %s404, 1
        %s1146 = smul.addr %s1145, 8
        %s1147 = scalar_lea.vmem [#allocation24], %s1146
        // Predicated region
        $region133: #{tpu_custom_call.1} parent=79 // pred_check
          %p1148 = pneg %p414
        $region134: #{tpu_custom_call.1} parent=79 // pred_check_branch
          %1150 = sbr.rel (%p1148) target = $region136
        $region135: #{tpu_custom_call.1} parent=79 // pred_region
          %1152 = vsyncadd %s1144, 0
          %s1153 = sadd.s32 %s44, %s45
          %s1154 = smul.addr %s1153, 8
          %s1155 = scalar_lea.hbm %s15, %s1154
          %s1157 = sshll.u32 %s1147, 4
          %s1158 = int_to_ptr.vmem [resolvable:$true] %s1157
          %s1159 = sshll.u32 %s1155, 4
          %s1160 = int_to_ptr.hbm [resolvable:$true] %s1159
          %1162 = dma.vmem_to_hbm [thread:$0]  %s1158, 128, %s1160, %s1144
        $region136: #{tpu_custom_call.1} parent=79 // pred_fallthru
          _
        // Predicated region
        $region137: #{tpu_custom_call.1} parent=79 // pred_check
          %p1163 = pneg %p440
        $region138: #{tpu_custom_call.1} parent=79 // pred_check_branch
          %1165 = sbr.rel (%p1163) target = $region140
        $region139: #{tpu_custom_call.1} parent=79 // pred_region
          %1167 = vsyncadd [#allocation26], 0
          %s1168 = smul.addr %s44, 8
          %s1169 = scalar_lea.hbm %s16, %s1168
          %s1171 = sshll.u32 [#allocation25], 4
          %s1172 = int_to_ptr.vmem [resolvable:$true] %s1171
          %s1173 = sshll.u32 %s1169, 4
          %s1174 = int_to_ptr.hbm [resolvable:$true] %s1173
          %1176 = dma.vmem_to_hbm [thread:$0]  %s1172, 128, %s1174, [#allocation26]
        $region140: #{tpu_custom_call.1} parent=79 // pred_fallthru
          _
        // Predicated region
        $region141: #{tpu_custom_call.1} parent=79 // pred_check
          %p1177 = pneg %p440
        $region142: #{tpu_custom_call.1} parent=79 // pred_check_branch
          %1179 = sbr.rel (%p1177) target = $region144
        $region143: #{tpu_custom_call.1} parent=79 // pred_region
          %1181 = dma.done [#allocation26], 128
        $region144: #{tpu_custom_call.1} parent=79 // pred_fallthru
          _
      $region80: #{tpu_custom_call.1} parent=5 // pred_fallthru
        _
      %p1182 = scmp.le.s32.totalorder 2, %s35
      // Predicated region
      $region145: #{tpu_custom_call.1} parent=5 // pred_check
        %p1183 = pneg %p1182
      $region146: #{tpu_custom_call.1} parent=5 // pred_check_branch
        %1185 = sbr.rel (%p1183) target = $region148
      $region147: #{tpu_custom_call.1} parent=5 // pred_region
        %s1186 = ssub.s32 %s35, 2
        // Predicated region
        $region149: #{tpu_custom_call.1} parent=147 // pred_check
          %p1187 = pneg %p420
        $region150: #{tpu_custom_call.1} parent=147 // pred_check_branch
          %1189 = sbr.rel (%p1187) target = $region152
        $region151: #{tpu_custom_call.1} parent=147 // pred_region
          %s1190 = sand.u32 %s405, 1
          %s1191 = scalar_lea.sflag [#allocation8], %s1190
          %s1192 = sand.u32 %s405, 1
          %s1193 = smul.addr %s1192, 8
          %s1194 = scalar_lea.vmem [#allocation24], %s1193
          %1196 = dma.done %s1191, 128
        $region152: #{tpu_custom_call.1} parent=147 // pred_fallthru
          _
      $region148: #{tpu_custom_call.1} parent=5 // pred_fallthru
        _
    $region6: #{tpu_custom_call.1} parent=1 // loop_footer
      %s39 = sadd.s32 1, %s35
    $region7: #{tpu_custom_call.1} parent=1 // loop_footer_branch
      %34 = sbr.rel target = $region3
    $region8: #{tpu_custom_call.1} parent=1 // loop_exit
      _
    %1197 = vsyncpa [#allocation7], 1
    %s1198 = scalar_lea.sflag [#allocation7], 1
    %1199 = vsyncpa %s1198, 1
    %1200 = vsyncpa [#allocation10], 1
    %1201 = vsyncpa [#allocation13], 1
    %1202 = vsyncpa [#allocation16], 1
    %1203 = vsyncpa [#allocation19], 1
    %1204 = vsyncpa [#allocation22], 1
    %1205 = vsyncpa [#allocation8], 1
    %s1206 = scalar_lea.sflag [#allocation8], 1
    %1207 = vsyncpa %s1206, 1
    %1208 = vsyncpa [#allocation26], 1

</llo_original>
